<compile_context>
chip_gen: v6e
topology: v6e:2x2x1
jax: 0.10.0
libtpu: 0.0.40
codegen_flags: <defaults>
</compile_context>

<pallas_src>
import functools

import jax
import jax.numpy as jnp
from jax.experimental import pallas as pl
from jax.experimental.pallas import tpu as pltpu


def airl_disc_kernel(state_ref, onehot_ref, next_state_ref, policy_ref,
                     wg_ref, bg_ref, emb_ref,
                     w1_ref, b1_ref, w2_ref, b2_ref, w3_ref, b3_ref,
                     d_ref, *, discount):
    # Hoist weight/bias loads (and their broadcasts) once per tile.
    wg = wg_ref[...]        # (1, S)   -- PyTorch nn.Linear layout [out=1, in]
    bg = bg_ref[...]        # (1, 1)
    emb = emb_ref[...]      # (1, A)   -- embedding table transposed
    w1 = w1_ref[...]        # (S, H)
    b1 = b1_ref[...]        # (1, H)
    w2 = w2_ref[...]        # (H, H)
    b2 = b2_ref[...]        # (1, H)
    w3 = w3_ref[...]        # (1, H)
    b3 = b3_ref[...]        # (1, 1)

    def value(x):           # h(x): MLP -> (TB, 1)
        h1 = jnp.tanh(jnp.dot(x, w1, preferred_element_type=jnp.float32) + b1)
        h2 = jnp.tanh(jnp.dot(h1, w2, preferred_element_type=jnp.float32) + b2)
        # width-1 head: VPU mul + lane reduce (avoid an N=1 MXU matmul)
        return jnp.sum(h2 * w3, axis=-1, keepdims=True) + b3

    state = state_ref[...]              # (TB, S)
    next_state = next_state_ref[...]    # (TB, S)

    # reward g(state, action): Linear(state) + Embedding[action]
    # (embedding lookup as a one-hot * table reduction -> exact gather)
    r = (jnp.sum(state * wg, axis=-1, keepdims=True) + bg
         + jnp.sum(onehot_ref[...] * emb, axis=-1, keepdims=True))

    f = r + discount * value(next_state) - value(state)      # (TB, 1)
    f_exp = jnp.exp(f)
    d_ref[...] = f_exp / (f_exp + policy_ref[...])


def airl_discriminator_forward(state, action, next_state, policy, params,
                               *, discount, block_b=512):
    """state/next_state: [B, S] f32; action: [B] int32; policy: [B] f32.

    Returns D = exp(f) / (exp(f) + policy), shape [B] (matches module.forward).
    """
    wg, bg, emb, w1, b1, w2, b2, w3, b3 = params
    B, S = state.shape
    A = emb.shape[1]
    H = w1.shape[1]

    TB = min(block_b, B)
    grid = (pl.cdiv(B, TB),)

    onehot = jax.nn.one_hot(action, A, dtype=jnp.float32)     # [B, A]
    policy2d = policy.reshape(B, 1).astype(jnp.float32)       # [B, 1]

    def batch_spec(feat):
        return pl.BlockSpec((TB, feat), lambda i: (i, 0))

    def resident(arr):
        return pl.BlockSpec(arr.shape, lambda i: (0, 0))

    # Advisory cost hint for XLA's scheduler.
    flops = int(2 * B * (S + A + S * H + H * H + H))
    transcendentals = int(B * (4 * H + 1))                    # 4 tanh layers + exp
    bytes_accessed = int(4 * (B * (2 * S + A + 2)
                              + S + 1 + A
                              + S * H + H + H * H + H + H + 1))

    d = pl.pallas_call(
        functools.partial(airl_disc_kernel, discount=float(discount)),
        grid=grid,
        in_specs=[
            batch_spec(S),                                    # state
            batch_spec(A),                                    # one-hot action
            batch_spec(S),                                    # next_state
            batch_spec(1),                                    # policy
            resident(wg), resident(bg), resident(emb),
            resident(w1), resident(b1),
            resident(w2), resident(b2),
            resident(w3), resident(b3),
        ],
        out_specs=pl.BlockSpec((TB, 1), lambda i: (i, 0)),
        out_shape=jax.ShapeDtypeStruct((B, 1), jnp.float32),
        compiler_params=pltpu.CompilerParams(
            dimension_semantics=("parallel",)),
        cost_estimate=pl.CostEstimate(
            flops=flops, transcendentals=transcendentals,
            bytes_accessed=bytes_accessed),
    )(state, onehot, next_state, policy2d,
      wg, bg, emb, w1, b1, w2, b2, w3, b3)
    return d[:, 0]


def init_airl_params(key, state_size, action_size, hidden_size):
    """Deterministic init mimicking PyTorch defaults.

    nn.Linear: U(-1/sqrt(fan_in), 1/sqrt(fan_in)); nn.Embedding: N(0, 1).
    Hidden-layer weights stored [in, out]; width-1 heads stored [1, in]
    (i.e. PyTorch's own [out, in] layout) for the lane-reduce formulation.
    """
    ks = jax.random.split(key, 9)

    def linear(kw, kb, fan_in, fan_out, transpose_w=False):
        bound = 1.0 / jnp.sqrt(jnp.float32(fan_in))
        shape = (fan_out, fan_in) if transpose_w else (fan_in, fan_out)
        w = jax.random.uniform(kw, shape, jnp.float32, -bound, bound)
        b = jax.random.uniform(kb, (1, fan_out), jnp.float32, -bound, bound)
        return w, b

    wg, bg = linear(ks[0], ks[1], state_size, 1, transpose_w=True)    # (1, S)
    emb = jax.random.normal(ks[2], (1, action_size), jnp.float32)     # (1, A)
    w1, b1 = linear(ks[3], ks[4], state_size, hidden_size)            # (S, H)
    w2, b2 = linear(ks[5], ks[6], hidden_size, hidden_size)           # (H, H)
    w3, b3 = linear(ks[7], ks[8], hidden_size, 1, transpose_w=True)   # (1, H)
    return (wg, bg, emb, w1, b1, w2, b2, w3, b3)


def airl_forward_ref(state, action, next_state, policy, params, *, discount):
    """Pure-JAX reference mirroring AIRLDiscriminator.forward."""
    wg, bg, emb, w1, b1, w2, b2, w3, b3 = params

    def value(x):
        h1 = jnp.tanh(x @ w1 + b1)
        h2 = jnp.tanh(h1 @ w2 + b2)
        return jnp.sum(h2 * w3, axis=-1) + b3[0, 0]

    r = jnp.sum(state * wg, axis=-1) + bg[0, 0] + emb[0, action]
    f = r + discount * value(next_state) - value(state)
    f_exp = jnp.exp(f)
    return f_exp / (f_exp + policy)


if __name__ == "__main__":
    B, STATE, ACTION, HIDDEN = 512, 16, 8, 32
    DISCOUNT = 0.99
    TB = 256   # -> grid of 2 batch tiles (exercises the pipelined grid path)

    key = jax.random.PRNGKey(0)
    k_s, k_a, k_ns, k_p, k_params = jax.random.split(key, 5)

    state = jax.random.normal(k_s, (B, STATE), jnp.float32)
    next_state = jax.random.normal(k_ns, (B, STATE), jnp.float32)
    action = jax.random.randint(k_a, (B,), 0, ACTION, jnp.int32)
    policy = jax.random.uniform(k_p, (B,), jnp.float32, 0.05, 0.95)
    params = init_airl_params(k_params, STATE, ACTION, HIDDEN)

    d = jax.block_until_ready(
        airl_discriminator_forward(state, action, next_state, policy, params,
                                   discount=DISCOUNT, block_b=TB))
    d_ref = airl_forward_ref(state, action, next_state, policy, params,
                             discount=DISCOUNT)

    assert d.shape == (B,)
    assert bool(jnp.all(jnp.isfinite(d)))
    assert bool(jnp.all((d > 0.0) & (d < 1.0)))
    assert jnp.allclose(d, d_ref, atol=1e-5, rtol=1e-5)

    print("KERNEL_OK")
</pallas_src>

<mosaic_0001>
module attributes {stable_mosaic.version = 11 : i64} {
  func.func @airl_disc_kernel(%arg0: i32, %arg1: memref<256x16xf32, #tpu.memory_space<vmem>>, %arg2: memref<256x8xf32, #tpu.memory_space<vmem>>, %arg3: memref<256x16xf32, #tpu.memory_space<vmem>>, %arg4: memref<256x1xf32, #tpu.memory_space<vmem>>, %arg5: memref<1x16xf32, #tpu.memory_space<vmem>>, %arg6: memref<1x1xf32, #tpu.memory_space<vmem>>, %arg7: memref<1x8xf32, #tpu.memory_space<vmem>>, %arg8: memref<16x32xf32, #tpu.memory_space<vmem>>, %arg9: memref<1x32xf32, #tpu.memory_space<vmem>>, %arg10: memref<32x32xf32, #tpu.memory_space<vmem>>, %arg11: memref<1x32xf32, #tpu.memory_space<vmem>>, %arg12: memref<1x32xf32, #tpu.memory_space<vmem>>, %arg13: memref<1x1xf32, #tpu.memory_space<vmem>>, %arg14: memref<256x1xf32, #tpu.memory_space<vmem>>) attributes {dimension_semantics = [#tpu.dimension_semantics<parallel>], iteration_bounds = array<i64: 2>, scalar_prefetch = 0 : i64, scratch_operands = 0 : i64, tpu.core_type = #tpu.core_type<tc>, window_params = [{transform_indices = @transform_0, window_bounds = array<i64: 256, 16>}, {transform_indices = @transform_1, window_bounds = array<i64: 256, 8>}, {transform_indices = @transform_2, window_bounds = array<i64: 256, 16>}, {transform_indices = @transform_3, window_bounds = array<i64: 256, 1>}, {pipeline_mode = #tpu.pipeline_mode<synchronous>, transform_indices = @transform_4, window_bounds = array<i64: 1, 16>}, {pipeline_mode = #tpu.pipeline_mode<synchronous>, transform_indices = @transform_5, window_bounds = array<i64: 1, 1>}, {pipeline_mode = #tpu.pipeline_mode<synchronous>, transform_indices = @transform_6, window_bounds = array<i64: 1, 8>}, {pipeline_mode = #tpu.pipeline_mode<synchronous>, transform_indices = @transform_7, window_bounds = array<i64: 16, 32>}, {pipeline_mode = #tpu.pipeline_mode<synchronous>, transform_indices = @transform_8, window_bounds = array<i64: 1, 32>}, {pipeline_mode = #tpu.pipeline_mode<synchronous>, transform_indices = @transform_9, window_bounds = array<i64: 32, 32>}, {pipeline_mode = #tpu.pipeline_mode<synchronous>, transform_indices = @transform_10, window_bounds = array<i64: 1, 32>}, {pipeline_mode = #tpu.pipeline_mode<synchronous>, transform_indices = @transform_11, window_bounds = array<i64: 1, 32>}, {pipeline_mode = #tpu.pipeline_mode<synchronous>, transform_indices = @transform_12, window_bounds = array<i64: 1, 1>}, {transform_indices = @transform_13, window_bounds = array<i64: 256, 1>}]} {
    %c0 = arith.constant 0 : index
    %c0_0 = arith.constant 0 : index
    %0 = vector.load %arg5[%c0, %c0_0] : memref<1x16xf32, #tpu.memory_space<vmem>>, vector<1x16xf32>
    %c0_1 = arith.constant 0 : index
    %c0_2 = arith.constant 0 : index
    %1 = vector.load %arg6[%c0_1, %c0_2] : memref<1x1xf32, #tpu.memory_space<vmem>>, vector<1x1xf32>
    %c0_3 = arith.constant 0 : index
    %c0_4 = arith.constant 0 : index
    %2 = vector.load %arg7[%c0_3, %c0_4] : memref<1x8xf32, #tpu.memory_space<vmem>>, vector<1x8xf32>
    %c0_5 = arith.constant 0 : index
    %c0_6 = arith.constant 0 : index
    %3 = vector.load %arg8[%c0_5, %c0_6] : memref<16x32xf32, #tpu.memory_space<vmem>>, vector<16x32xf32>
    %c0_7 = arith.constant 0 : index
    %c0_8 = arith.constant 0 : index
    %4 = vector.load %arg9[%c0_7, %c0_8] : memref<1x32xf32, #tpu.memory_space<vmem>>, vector<1x32xf32>
    %c0_9 = arith.constant 0 : index
    %c0_10 = arith.constant 0 : index
    %5 = vector.load %arg10[%c0_9, %c0_10] : memref<32x32xf32, #tpu.memory_space<vmem>>, vector<32x32xf32>
    %c0_11 = arith.constant 0 : index
    %c0_12 = arith.constant 0 : index
    %6 = vector.load %arg11[%c0_11, %c0_12] : memref<1x32xf32, #tpu.memory_space<vmem>>, vector<1x32xf32>
    %c0_13 = arith.constant 0 : index
    %c0_14 = arith.constant 0 : index
    %7 = vector.load %arg12[%c0_13, %c0_14] : memref<1x32xf32, #tpu.memory_space<vmem>>, vector<1x32xf32>
    %c0_15 = arith.constant 0 : index
    %c0_16 = arith.constant 0 : index
    %8 = vector.load %arg13[%c0_15, %c0_16] : memref<1x1xf32, #tpu.memory_space<vmem>>, vector<1x1xf32>
    %c0_17 = arith.constant 0 : index
    %c0_18 = arith.constant 0 : index
    %9 = vector.load %arg1[%c0_17, %c0_18] : memref<256x16xf32, #tpu.memory_space<vmem>>, vector<256x16xf32>
    %c0_19 = arith.constant 0 : index
    %c0_20 = arith.constant 0 : index
    %10 = vector.load %arg3[%c0_19, %c0_20] : memref<256x16xf32, #tpu.memory_space<vmem>>, vector<256x16xf32>
    %11 = vector.broadcast %0 : vector<1x16xf32> to vector<256x16xf32>
    %12 = arith.mulf %9, %11 : vector<256x16xf32>
    %cst = arith.constant dense<0.000000e+00> : vector<256xf32>
    %13 = vector.multi_reduction <add>, %12, %cst [1] : vector<256x16xf32> to vector<256xf32>
    %14 = vector.shape_cast %13 : vector<256xf32> to vector<256x1xf32>
    %15 = vector.broadcast %1 : vector<1x1xf32> to vector<256x1xf32>
    %16 = arith.addf %14, %15 : vector<256x1xf32>
    %c0_21 = arith.constant 0 : index
    %c0_22 = arith.constant 0 : index
    %17 = vector.load %arg2[%c0_21, %c0_22] : memref<256x8xf32, #tpu.memory_space<vmem>>, vector<256x8xf32>
    %18 = vector.broadcast %2 : vector<1x8xf32> to vector<256x8xf32>
    %19 = arith.mulf %17, %18 : vector<256x8xf32>
    %cst_23 = arith.constant dense<0.000000e+00> : vector<256xf32>
    %20 = vector.multi_reduction <add>, %19, %cst_23 [1] : vector<256x8xf32> to vector<256xf32>
    %21 = vector.shape_cast %20 : vector<256xf32> to vector<256x1xf32>
    %22 = arith.addf %16, %21 : vector<256x1xf32>
    %cst_24 = arith.constant dense<0.000000e+00> : vector<256x32xf32>
    %23 = tpu.matmul %10, %3, %cst_24 {dimension_numbers = #tpu.dot_dimension_numbers<[1], [0], [0], [1], [0, 0, 1, 1], [], []>} : vector<256x16xf32>, vector<16x32xf32>, vector<256x32xf32> -> vector<256x32xf32>
    %24 = vector.broadcast %4 : vector<1x32xf32> to vector<256x32xf32>
    %25 = arith.addf %23, %24 : vector<256x32xf32>
    %26 = math.tanh %25 : vector<256x32xf32>
    %cst_25 = arith.constant dense<0.000000e+00> : vector<256x32xf32>
    %27 = tpu.matmul %26, %5, %cst_25 {dimension_numbers = #tpu.dot_dimension_numbers<[1], [0], [0], [1], [0, 0, 1, 1], [], []>} : vector<256x32xf32>, vector<32x32xf32>, vector<256x32xf32> -> vector<256x32xf32>
    %28 = vector.broadcast %6 : vector<1x32xf32> to vector<256x32xf32>
    %29 = arith.addf %27, %28 : vector<256x32xf32>
    %30 = math.tanh %29 : vector<256x32xf32>
    %31 = vector.broadcast %7 : vector<1x32xf32> to vector<256x32xf32>
    %32 = arith.mulf %30, %31 : vector<256x32xf32>
    %cst_26 = arith.constant dense<0.000000e+00> : vector<256xf32>
    %33 = vector.multi_reduction <add>, %32, %cst_26 [1] : vector<256x32xf32> to vector<256xf32>
    %34 = vector.shape_cast %33 : vector<256xf32> to vector<256x1xf32>
    %35 = vector.broadcast %8 : vector<1x1xf32> to vector<256x1xf32>
    %36 = arith.addf %34, %35 : vector<256x1xf32>
    %cst_27 = arith.constant 9.900000e-01 : f32
    %37 = vector.broadcast %cst_27 : f32 to vector<256x1xf32>
    %38 = arith.mulf %37, %36 : vector<256x1xf32>
    %39 = arith.addf %22, %38 : vector<256x1xf32>
    %cst_28 = arith.constant dense<0.000000e+00> : vector<256x32xf32>
    %40 = tpu.matmul %9, %3, %cst_28 {dimension_numbers = #tpu.dot_dimension_numbers<[1], [0], [0], [1], [0, 0, 1, 1], [], []>} : vector<256x16xf32>, vector<16x32xf32>, vector<256x32xf32> -> vector<256x32xf32>
    %41 = vector.broadcast %4 : vector<1x32xf32> to vector<256x32xf32>
    %42 = arith.addf %40, %41 : vector<256x32xf32>
    %43 = math.tanh %42 : vector<256x32xf32>
    %cst_29 = arith.constant dense<0.000000e+00> : vector<256x32xf32>
    %44 = tpu.matmul %43, %5, %cst_29 {dimension_numbers = #tpu.dot_dimension_numbers<[1], [0], [0], [1], [0, 0, 1, 1], [], []>} : vector<256x32xf32>, vector<32x32xf32>, vector<256x32xf32> -> vector<256x32xf32>
    %45 = vector.broadcast %6 : vector<1x32xf32> to vector<256x32xf32>
    %46 = arith.addf %44, %45 : vector<256x32xf32>
    %47 = math.tanh %46 : vector<256x32xf32>
    %48 = vector.broadcast %7 : vector<1x32xf32> to vector<256x32xf32>
    %49 = arith.mulf %47, %48 : vector<256x32xf32>
    %cst_30 = arith.constant dense<0.000000e+00> : vector<256xf32>
    %50 = vector.multi_reduction <add>, %49, %cst_30 [1] : vector<256x32xf32> to vector<256xf32>
    %51 = vector.shape_cast %50 : vector<256xf32> to vector<256x1xf32>
    %52 = vector.broadcast %8 : vector<1x1xf32> to vector<256x1xf32>
    %53 = arith.addf %51, %52 : vector<256x1xf32>
    %54 = arith.subf %39, %53 : vector<256x1xf32>
    %55 = math.exp %54 : vector<256x1xf32>
    %c0_31 = arith.constant 0 : index
    %c0_32 = arith.constant 0 : index
    %56 = vector.load %arg4[%c0_31, %c0_32] : memref<256x1xf32, #tpu.memory_space<vmem>>, vector<256x1xf32>
    %57 = arith.addf %55, %56 : vector<256x1xf32>
    %58 = arith.divf %55, %57 : vector<256x1xf32>
    %c0_33 = arith.constant 0 : index
    %c0_34 = arith.constant 0 : index
    %59 = vector.load %arg14[%c0_33, %c0_34] : memref<256x1xf32, #tpu.memory_space<vmem>>, vector<256x1xf32>
    tpu.vector_store %arg14[%c0_33, %c0_34], %58 {strides = array<i32>} : memref<256x1xf32, #tpu.memory_space<vmem>>, vector<256x1xf32>,
    return
  }
  func.func @transform_0(%arg0: i32) -> (i32, i32) {
    %c0_i32 = arith.constant 0 : i32
    %c0_i32_0 = arith.constant 0 : i32
    return %arg0, %c0_i32 : i32, i32
  }
  func.func @transform_1(%arg0: i32) -> (i32, i32) {
    %c0_i32 = arith.constant 0 : i32
    %c0_i32_0 = arith.constant 0 : i32
    return %arg0, %c0_i32 : i32, i32
  }
  func.func @transform_2(%arg0: i32) -> (i32, i32) {
    %c0_i32 = arith.constant 0 : i32
    %c0_i32_0 = arith.constant 0 : i32
    return %arg0, %c0_i32 : i32, i32
  }
  func.func @transform_3(%arg0: i32) -> (i32, i32) {
    %c0_i32 = arith.constant 0 : i32
    %c0_i32_0 = arith.constant 0 : i32
    return %arg0, %c0_i32 : i32, i32
  }
  func.func @transform_4(%arg0: i32) -> (i32, i32) {
    %c0_i32 = arith.constant 0 : i32
    %c0_i32_0 = arith.constant 0 : i32
    %c0_i32_1 = arith.constant 0 : i32
    return %c0_i32, %c0_i32_0 : i32, i32
  }
  func.func @transform_5(%arg0: i32) -> (i32, i32) {
    %c0_i32 = arith.constant 0 : i32
    %c0_i32_0 = arith.constant 0 : i32
    %c0_i32_1 = arith.constant 0 : i32
    return %c0_i32, %c0_i32_0 : i32, i32
  }
  func.func @transform_6(%arg0: i32) -> (i32, i32) {
    %c0_i32 = arith.constant 0 : i32
    %c0_i32_0 = arith.constant 0 : i32
    %c0_i32_1 = arith.constant 0 : i32
    return %c0_i32, %c0_i32_0 : i32, i32
  }
  func.func @transform_7(%arg0: i32) -> (i32, i32) {
    %c0_i32 = arith.constant 0 : i32
    %c0_i32_0 = arith.constant 0 : i32
    %c0_i32_1 = arith.constant 0 : i32
    return %c0_i32, %c0_i32_0 : i32, i32
  }
  func.func @transform_8(%arg0: i32) -> (i32, i32) {
    %c0_i32 = arith.constant 0 : i32
    %c0_i32_0 = arith.constant 0 : i32
    %c0_i32_1 = arith.constant 0 : i32
    return %c0_i32, %c0_i32_0 : i32, i32
  }
  func.func @transform_9(%arg0: i32) -> (i32, i32) {
    %c0_i32 = arith.constant 0 : i32
    %c0_i32_0 = arith.constant 0 : i32
    %c0_i32_1 = arith.constant 0 : i32
    return %c0_i32, %c0_i32_0 : i32, i32
  }
  func.func @transform_10(%arg0: i32) -> (i32, i32) {
    %c0_i32 = arith.constant 0 : i32
    %c0_i32_0 = arith.constant 0 : i32
    %c0_i32_1 = arith.constant 0 : i32
    return %c0_i32, %c0_i32_0 : i32, i32
  }
  func.func @transform_11(%arg0: i32) -> (i32, i32) {
    %c0_i32 = arith.constant 0 : i32
    %c0_i32_0 = arith.constant 0 : i32
    %c0_i32_1 = arith.constant 0 : i32
    return %c0_i32, %c0_i32_0 : i32, i32
  }
  func.func @transform_12(%arg0: i32) -> (i32, i32) {
    %c0_i32 = arith.constant 0 : i32
    %c0_i32_0 = arith.constant 0 : i32
    %c0_i32_1 = arith.constant 0 : i32
    return %c0_i32, %c0_i32_0 : i32, i32
  }
  func.func @transform_13(%arg0: i32) -> (i32, i32) {
    %c0_i32 = arith.constant 0 : i32
    %c0_i32_0 = arith.constant 0 : i32
    return %arg0, %c0_i32 : i32, i32
  }
}

</mosaic_0001>

<llo_original>
// kernel: tpu_custom_call.1
$region0: #{tpu_custom_call.1}
  #allocation0 [shape = 'u32[]', space=smem, size = 0x4, offset = 0x4, fixed_abs, tag = 'smem constant byte address 0x4 - core index']
  #allocation1 [shape = 'u32[144,128]{1,0:T(1,128)}', space=vmem, size = 0x12000, scoped, tag = 'internal scratch']
  #allocation2 [shape = 'f32[1,1]{1,0:T(1,128)S(1)}', space=vmem, size = 0x200, scoped, tag = 'scoped memory for tpu_custom_call.1']
  #allocation3 [shape = 'f32[1,1]{1,0:T(1,128)S(1)}', space=vmem, size = 0x200, scoped, tag = 'scoped memory for tpu_custom_call.1']
  %s0 = inlined_call_operand.vmem [shape: f32[512,16], index: 0, kind: input, shape index: {}]
  %s1 = inlined_call_operand.vmem [shape: f32[512,8], index: 1, kind: input, shape index: {}]
  %s2 = inlined_call_operand.vmem [shape: f32[512,16], index: 2, kind: input, shape index: {}]
  %s3 = inlined_call_operand.vmem [shape: f32[512,1], index: 3, kind: input, shape index: {}]
  %s4 = inlined_call_operand.vmem [shape: f32[1,16], index: 4, kind: input, shape index: {}]
  %s5 = inlined_call_operand.<no memory space> [shape: f32[1,1], index: 5, kind: input, shape index: {}]
  %s6 = inlined_call_operand.vmem [shape: f32[1,8], index: 6, kind: input, shape index: {}]
  %s7 = inlined_call_operand.vmem [shape: f32[16,32], index: 7, kind: input, shape index: {}]
  %s8 = inlined_call_operand.vmem [shape: f32[1,32], index: 8, kind: input, shape index: {}]
  %s9 = inlined_call_operand.vmem [shape: f32[32,32], index: 9, kind: input, shape index: {}]
  %s10 = inlined_call_operand.vmem [shape: f32[1,32], index: 10, kind: input, shape index: {}]
  %s11 = inlined_call_operand.vmem [shape: f32[1,32], index: 11, kind: input, shape index: {}]
  %s12 = inlined_call_operand.<no memory space> [shape: f32[1,1], index: 12, kind: input, shape index: {}]
  %s13 = inlined_call_operand.vmem [shape: f32[512,1], index: 13, kind: output, shape index: {}]
  %s14 = sld [smem:[#allocation0]]
  $region85: #{tpu_custom_call.1} parent=0
    _
  %s16 = ssub.s32 1, %s14
  %s17 = scalar_select 0, %s16, %s14
  %v18 = vstv %s5
  %19 = vst [vmem:[#allocation2] sm:$0x1] %v18
  %v20 = vstv %s12
  %21 = vst [vmem:[#allocation3] sm:$0x1] %v20
  loop: start=0, step=1, limit=4
  $region2: #{tpu_custom_call.1} parent=0 // loop_pre_header
    _
  $region3: #{tpu_custom_call.1} parent=0 // loop_header
    %s23 = sphi 0, %s27
    %p24 = scmp.ge.s32.totalorder %s23, 4
    %s33 = sphi 0, %s35
    %s36 = sphi 0, %s33
    %s37 = sphi 0, %s36
    %s53 = sphi 0, %s37
    %s59 = sphi 0, %s61
    %s62 = sphi 0, %s59
    %s63 = sphi 0, %s62
    %s79 = sphi 0, %s63
    %s85 = sphi 0, %s87
    %s88 = sphi 0, %s85
    %s89 = sphi 0, %s88
    %s105 = sphi 0, %s89
    %s111 = sphi 0, %s113
    %s114 = sphi 0, %s111
    %s115 = sphi 0, %s114
    %s131 = sphi 0, %s115
    %s135 = sphi 0, %s135
    %s137 = sphi 0, %s135
    %s138 = sphi 0, %s137
    %s152 = sphi 0, %s138
    %s156 = sphi 0, %s156
    %s158 = sphi 0, %s156
    %s159 = sphi 0, %s158
    %s173 = sphi 0, %s159
    %s177 = sphi 0, %s177
    %s179 = sphi 0, %s177
    %s180 = sphi 0, %s179
    %s194 = sphi 0, %s180
    %s198 = sphi 0, %s198
    %s200 = sphi 0, %s198
    %s201 = sphi 0, %s200
    %s215 = sphi 0, %s201
    %s219 = sphi 0, %s219
    %s221 = sphi 0, %s219
    %s222 = sphi 0, %s221
    %s236 = sphi 0, %s222
    %s240 = sphi 0, %s240
    %s242 = sphi 0, %s240
    %s243 = sphi 0, %s242
    %s257 = sphi 0, %s243
    %s261 = sphi 0, %s261
    %s263 = sphi 0, %s261
    %s264 = sphi 0, %s263
    %s278 = sphi 0, %s264
    %s282 = sphi 0, %s282
    %s284 = sphi 0, %s282
    %s285 = sphi 0, %s284
    %s299 = sphi 0, %s285
    %s303 = sphi 0, %s303
    %s305 = sphi 0, %s303
    %s306 = sphi 0, %s305
    %s320 = sphi 0, %s306
    %s326 = sphi 0, %s328
    %s329 = sphi 0, %s326
    %s330 = sphi 0, %s329
    %s346 = sphi 0, %s330
  $region4: #{tpu_custom_call.1} parent=0 // loop_header_branch
    %26 = sbr.rel (%p24) target = $region8
  $region5: #{tpu_custom_call.1} parent=0 // loop_body
    %s28 = ssub.s32 %s23, 1
    %s29 = ssub.s32 %s23, 2
    %s30 = sadd.s32 %s23, 1
    %s31 = ssub.s32 %s23, %s30
    %p32 = scmp.eq.s32.totalorder %s31, 0
    %s34 = sadd.s32 %s33, 1
    %s35 = scalar_select %p32, %s33, %s34
    %p38 = pneg %p32
    %p39 = scmp.eq.s32.totalorder %s23, 1
    %p40 = por %p38, %p39
    %p41 = scmp.ne.s32.totalorder %s33, %s36
    %p42 = scmp.eq.s32.totalorder %s23, 0
    %p43 = por %p41, %p42
    %p44 = scmp.ne.s32.totalorder %s33, %s36
    %p45 = scmp.eq.s32.totalorder %s28, 1
    %p46 = por %p44, %p45
    %p47 = scmp.ne.s32.totalorder %s36, %s37
    %p48 = scmp.eq.s32.totalorder %s28, 0
    %p49 = por %p47, %p48
    %p50 = scmp.ne.s32.totalorder %s36, %s37
    %p51 = scmp.eq.s32.totalorder %s29, 1
    %p52 = por %p50, %p51
    %p54 = scmp.ne.s32.totalorder %s37, %s53
    %p55 = scmp.eq.s32.totalorder %s29, 0
    %p56 = por %p54, %p55
    %s57 = ssub.s32 %s23, %s30
    %p58 = scmp.eq.s32.totalorder %s57, 0
    %s60 = sadd.s32 %s59, 1
    %s61 = scalar_select %p58, %s59, %s60
    %p64 = pneg %p58
    %p65 = scmp.eq.s32.totalorder %s23, 1
    %p66 = por %p64, %p65
    %p67 = scmp.ne.s32.totalorder %s59, %s62
    %p68 = scmp.eq.s32.totalorder %s23, 0
    %p69 = por %p67, %p68
    %p70 = scmp.ne.s32.totalorder %s59, %s62
    %p71 = scmp.eq.s32.totalorder %s28, 1
    %p72 = por %p70, %p71
    %p73 = scmp.ne.s32.totalorder %s62, %s63
    %p74 = scmp.eq.s32.totalorder %s28, 0
    %p75 = por %p73, %p74
    %p76 = scmp.ne.s32.totalorder %s62, %s63
    %p77 = scmp.eq.s32.totalorder %s29, 1
    %p78 = por %p76, %p77
    %p80 = scmp.ne.s32.totalorder %s63, %s79
    %p81 = scmp.eq.s32.totalorder %s29, 0
    %p82 = por %p80, %p81
    %s83 = ssub.s32 %s23, %s30
    %p84 = scmp.eq.s32.totalorder %s83, 0
    %s86 = sadd.s32 %s85, 1
    %s87 = scalar_select %p84, %s85, %s86
    %p90 = pneg %p84
    %p91 = scmp.eq.s32.totalorder %s23, 1
    %p92 = por %p90, %p91
    %p93 = scmp.ne.s32.totalorder %s85, %s88
    %p94 = scmp.eq.s32.totalorder %s23, 0
    %p95 = por %p93, %p94
    %p96 = scmp.ne.s32.totalorder %s85, %s88
    %p97 = scmp.eq.s32.totalorder %s28, 1
    %p98 = por %p96, %p97
    %p99 = scmp.ne.s32.totalorder %s88, %s89
    %p100 = scmp.eq.s32.totalorder %s28, 0
    %p101 = por %p99, %p100
    %p102 = scmp.ne.s32.totalorder %s88, %s89
    %p103 = scmp.eq.s32.totalorder %s29, 1
    %p104 = por %p102, %p103
    %p106 = scmp.ne.s32.totalorder %s89, %s105
    %p107 = scmp.eq.s32.totalorder %s29, 0
    %p108 = por %p106, %p107
    %s109 = ssub.s32 %s23, %s30
    %p110 = scmp.eq.s32.totalorder %s109, 0
    %s112 = sadd.s32 %s111, 1
    %s113 = scalar_select %p110, %s111, %s112
    %p116 = pneg %p110
    %p117 = scmp.eq.s32.totalorder %s23, 1
    %p118 = por %p116, %p117
    %p119 = scmp.ne.s32.totalorder %s111, %s114
    %p120 = scmp.eq.s32.totalorder %s23, 0
    %p121 = por %p119, %p120
    %p122 = scmp.ne.s32.totalorder %s111, %s114
    %p123 = scmp.eq.s32.totalorder %s28, 1
    %p124 = por %p122, %p123
    %p125 = scmp.ne.s32.totalorder %s114, %s115
    %p126 = scmp.eq.s32.totalorder %s28, 0
    %p127 = por %p125, %p126
    %p128 = scmp.ne.s32.totalorder %s114, %s115
    %p129 = scmp.eq.s32.totalorder %s29, 1
    %p130 = por %p128, %p129
    %p132 = scmp.ne.s32.totalorder %s115, %s131
    %p133 = scmp.eq.s32.totalorder %s29, 0
    %p134 = por %p132, %p133
    %s136 = sadd.s32 %s135, 1
    %p139 = scmp.eq.s32.totalorder %s23, 1
    %p140 = scmp.ne.s32.totalorder %s135, %s137
    %p141 = scmp.eq.s32.totalorder %s23, 0
    %p142 = por %p140, %p141
    %p143 = scmp.ne.s32.totalorder %s135, %s137
    %p144 = scmp.eq.s32.totalorder %s28, 1
    %p145 = por %p143, %p144
    %p146 = scmp.ne.s32.totalorder %s137, %s138
    %p147 = scmp.eq.s32.totalorder %s28, 0
    %p148 = por %p146, %p147
    %p149 = scmp.ne.s32.totalorder %s137, %s138
    %p150 = scmp.eq.s32.totalorder %s29, 1
    %p151 = por %p149, %p150
    %p153 = scmp.ne.s32.totalorder %s138, %s152
    %p154 = scmp.eq.s32.totalorder %s29, 0
    %p155 = por %p153, %p154
    %s157 = sadd.s32 %s156, 1
    %p160 = scmp.eq.s32.totalorder %s23, 1
    %p161 = scmp.ne.s32.totalorder %s156, %s158
    %p162 = scmp.eq.s32.totalorder %s23, 0
    %p163 = por %p161, %p162
    %p164 = scmp.ne.s32.totalorder %s156, %s158
    %p165 = scmp.eq.s32.totalorder %s28, 1
    %p166 = por %p164, %p165
    %p167 = scmp.ne.s32.totalorder %s158, %s159
    %p168 = scmp.eq.s32.totalorder %s28, 0
    %p169 = por %p167, %p168
    %p170 = scmp.ne.s32.totalorder %s158, %s159
    %p171 = scmp.eq.s32.totalorder %s29, 1
    %p172 = por %p170, %p171
    %p174 = scmp.ne.s32.totalorder %s159, %s173
    %p175 = scmp.eq.s32.totalorder %s29, 0
    %p176 = por %p174, %p175
    %s178 = sadd.s32 %s177, 1
    %p181 = scmp.eq.s32.totalorder %s23, 1
    %p182 = scmp.ne.s32.totalorder %s177, %s179
    %p183 = scmp.eq.s32.totalorder %s23, 0
    %p184 = por %p182, %p183
    %p185 = scmp.ne.s32.totalorder %s177, %s179
    %p186 = scmp.eq.s32.totalorder %s28, 1
    %p187 = por %p185, %p186
    %p188 = scmp.ne.s32.totalorder %s179, %s180
    %p189 = scmp.eq.s32.totalorder %s28, 0
    %p190 = por %p188, %p189
    %p191 = scmp.ne.s32.totalorder %s179, %s180
    %p192 = scmp.eq.s32.totalorder %s29, 1
    %p193 = por %p191, %p192
    %p195 = scmp.ne.s32.totalorder %s180, %s194
    %p196 = scmp.eq.s32.totalorder %s29, 0
    %p197 = por %p195, %p196
    %s199 = sadd.s32 %s198, 1
    %p202 = scmp.eq.s32.totalorder %s23, 1
    %p203 = scmp.ne.s32.totalorder %s198, %s200
    %p204 = scmp.eq.s32.totalorder %s23, 0
    %p205 = por %p203, %p204
    %p206 = scmp.ne.s32.totalorder %s198, %s200
    %p207 = scmp.eq.s32.totalorder %s28, 1
    %p208 = por %p206, %p207
    %p209 = scmp.ne.s32.totalorder %s200, %s201
    %p210 = scmp.eq.s32.totalorder %s28, 0
    %p211 = por %p209, %p210
    %p212 = scmp.ne.s32.totalorder %s200, %s201
    %p213 = scmp.eq.s32.totalorder %s29, 1
    %p214 = por %p212, %p213
    %p216 = scmp.ne.s32.totalorder %s201, %s215
    %p217 = scmp.eq.s32.totalorder %s29, 0
    %p218 = por %p216, %p217
    %s220 = sadd.s32 %s219, 1
    %p223 = scmp.eq.s32.totalorder %s23, 1
    %p224 = scmp.ne.s32.totalorder %s219, %s221
    %p225 = scmp.eq.s32.totalorder %s23, 0
    %p226 = por %p224, %p225
    %p227 = scmp.ne.s32.totalorder %s219, %s221
    %p228 = scmp.eq.s32.totalorder %s28, 1
    %p229 = por %p227, %p228
    %p230 = scmp.ne.s32.totalorder %s221, %s222
    %p231 = scmp.eq.s32.totalorder %s28, 0
    %p232 = por %p230, %p231
    %p233 = scmp.ne.s32.totalorder %s221, %s222
    %p234 = scmp.eq.s32.totalorder %s29, 1
    %p235 = por %p233, %p234
    %p237 = scmp.ne.s32.totalorder %s222, %s236
    %p238 = scmp.eq.s32.totalorder %s29, 0
    %p239 = por %p237, %p238
    %s241 = sadd.s32 %s240, 1
    %p244 = scmp.eq.s32.totalorder %s23, 1
    %p245 = scmp.ne.s32.totalorder %s240, %s242
    %p246 = scmp.eq.s32.totalorder %s23, 0
    %p247 = por %p245, %p246
    %p248 = scmp.ne.s32.totalorder %s240, %s242
    %p249 = scmp.eq.s32.totalorder %s28, 1
    %p250 = por %p248, %p249
    %p251 = scmp.ne.s32.totalorder %s242, %s243
    %p252 = scmp.eq.s32.totalorder %s28, 0
    %p253 = por %p251, %p252
    %p254 = scmp.ne.s32.totalorder %s242, %s243
    %p255 = scmp.eq.s32.totalorder %s29, 1
    %p256 = por %p254, %p255
    %p258 = scmp.ne.s32.totalorder %s243, %s257
    %p259 = scmp.eq.s32.totalorder %s29, 0
    %p260 = por %p258, %p259
    %s262 = sadd.s32 %s261, 1
    %p265 = scmp.eq.s32.totalorder %s23, 1
    %p266 = scmp.ne.s32.totalorder %s261, %s263
    %p267 = scmp.eq.s32.totalorder %s23, 0
    %p268 = por %p266, %p267
    %p269 = scmp.ne.s32.totalorder %s261, %s263
    %p270 = scmp.eq.s32.totalorder %s28, 1
    %p271 = por %p269, %p270
    %p272 = scmp.ne.s32.totalorder %s263, %s264
    %p273 = scmp.eq.s32.totalorder %s28, 0
    %p274 = por %p272, %p273
    %p275 = scmp.ne.s32.totalorder %s263, %s264
    %p276 = scmp.eq.s32.totalorder %s29, 1
    %p277 = por %p275, %p276
    %p279 = scmp.ne.s32.totalorder %s264, %s278
    %p280 = scmp.eq.s32.totalorder %s29, 0
    %p281 = por %p279, %p280
    %s283 = sadd.s32 %s282, 1
    %p286 = scmp.eq.s32.totalorder %s23, 1
    %p287 = scmp.ne.s32.totalorder %s282, %s284
    %p288 = scmp.eq.s32.totalorder %s23, 0
    %p289 = por %p287, %p288
    %p290 = scmp.ne.s32.totalorder %s282, %s284
    %p291 = scmp.eq.s32.totalorder %s28, 1
    %p292 = por %p290, %p291
    %p293 = scmp.ne.s32.totalorder %s284, %s285
    %p294 = scmp.eq.s32.totalorder %s28, 0
    %p295 = por %p293, %p294
    %p296 = scmp.ne.s32.totalorder %s284, %s285
    %p297 = scmp.eq.s32.totalorder %s29, 1
    %p298 = por %p296, %p297
    %p300 = scmp.ne.s32.totalorder %s285, %s299
    %p301 = scmp.eq.s32.totalorder %s29, 0
    %p302 = por %p300, %p301
    %s304 = sadd.s32 %s303, 1
    %p307 = scmp.eq.s32.totalorder %s23, 1
    %p308 = scmp.ne.s32.totalorder %s303, %s305
    %p309 = scmp.eq.s32.totalorder %s23, 0
    %p310 = por %p308, %p309
    %p311 = scmp.ne.s32.totalorder %s303, %s305
    %p312 = scmp.eq.s32.totalorder %s28, 1
    %p313 = por %p311, %p312
    %p314 = scmp.ne.s32.totalorder %s305, %s306
    %p315 = scmp.eq.s32.totalorder %s28, 0
    %p316 = por %p314, %p315
    %p317 = scmp.ne.s32.totalorder %s305, %s306
    %p318 = scmp.eq.s32.totalorder %s29, 1
    %p319 = por %p317, %p318
    %p321 = scmp.ne.s32.totalorder %s306, %s320
    %p322 = scmp.eq.s32.totalorder %s29, 0
    %p323 = por %p321, %p322
    %s324 = ssub.s32 %s23, %s30
    %p325 = scmp.eq.s32.totalorder %s324, 0
    %s327 = sadd.s32 %s326, 1
    %s328 = scalar_select %p325, %s326, %s327
    %p331 = pneg %p325
    %p332 = scmp.eq.s32.totalorder %s23, 1
    %p333 = por %p331, %p332
    %p334 = scmp.ne.s32.totalorder %s326, %s329
    %p335 = scmp.eq.s32.totalorder %s23, 0
    %p336 = por %p334, %p335
    %p337 = scmp.ne.s32.totalorder %s326, %s329
    %p338 = scmp.eq.s32.totalorder %s28, 1
    %p339 = por %p337, %p338
    %p340 = scmp.ne.s32.totalorder %s329, %s330
    %p341 = scmp.eq.s32.totalorder %s28, 0
    %p342 = por %p340, %p341
    %p343 = scmp.ne.s32.totalorder %s329, %s330
    %p344 = scmp.eq.s32.totalorder %s29, 1
    %p345 = por %p343, %p344
    %p347 = scmp.ne.s32.totalorder %s330, %s346
    %p348 = scmp.eq.s32.totalorder %s29, 0
    %p349 = por %p347, %p348
    %p350 = scmp.le.s32.totalorder 1, %s23
    %p351 = scmp.lt.s32.totalorder %s23, 3
    %p352 = pnand %p350, %p351
    %p353 = pneg %p352
    // Predicated region
    $region9: #{tpu_custom_call.1} parent=5 // pred_check
      _
    $region10: #{tpu_custom_call.1} parent=5 // pred_check_branch
      %355 = sbr.rel (%p352) target = $region12
    $region11: #{tpu_custom_call.1} parent=5 // pred_region
      %s356 = ssub.s32 %s23, 1
      // Predicated region
      $region13: #{tpu_custom_call.1} parent=11 // pred_check
        %p357 = pneg %p148
      $region14: #{tpu_custom_call.1} parent=11 // pred_check_branch
        %359 = sbr.rel (%p357) target = $region16
      $region15: #{tpu_custom_call.1} parent=11 // pred_region
        _
      $region16: #{tpu_custom_call.1} parent=11 // pred_fallthru
        _
      // Predicated region
      $region17: #{tpu_custom_call.1} parent=11 // pred_check
        %p360 = pneg %p169
      $region18: #{tpu_custom_call.1} parent=11 // pred_check_branch
        %362 = sbr.rel (%p360) target = $region20
      $region19: #{tpu_custom_call.1} parent=11 // pred_region
        _
      $region20: #{tpu_custom_call.1} parent=11 // pred_fallthru
        _
      // Predicated region
      $region21: #{tpu_custom_call.1} parent=11 // pred_check
        %p363 = pneg %p190
      $region22: #{tpu_custom_call.1} parent=11 // pred_check_branch
        %365 = sbr.rel (%p363) target = $region24
      $region23: #{tpu_custom_call.1} parent=11 // pred_region
        _
      $region24: #{tpu_custom_call.1} parent=11 // pred_fallthru
        _
      // Predicated region
      $region25: #{tpu_custom_call.1} parent=11 // pred_check
        %p366 = pneg %p211
      $region26: #{tpu_custom_call.1} parent=11 // pred_check_branch
        %368 = sbr.rel (%p366) target = $region28
      $region27: #{tpu_custom_call.1} parent=11 // pred_region
        _
      $region28: #{tpu_custom_call.1} parent=11 // pred_fallthru
        _
      // Predicated region
      $region29: #{tpu_custom_call.1} parent=11 // pred_check
        %p369 = pneg %p232
      $region30: #{tpu_custom_call.1} parent=11 // pred_check_branch
        %371 = sbr.rel (%p369) target = $region32
      $region31: #{tpu_custom_call.1} parent=11 // pred_region
        _
      $region32: #{tpu_custom_call.1} parent=11 // pred_fallthru
        _
      // Predicated region
      $region33: #{tpu_custom_call.1} parent=11 // pred_check
        %p372 = pneg %p253
      $region34: #{tpu_custom_call.1} parent=11 // pred_check_branch
        %374 = sbr.rel (%p372) target = $region36
      $region35: #{tpu_custom_call.1} parent=11 // pred_region
        _
      $region36: #{tpu_custom_call.1} parent=11 // pred_fallthru
        _
      // Predicated region
      $region37: #{tpu_custom_call.1} parent=11 // pred_check
        %p375 = pneg %p274
      $region38: #{tpu_custom_call.1} parent=11 // pred_check_branch
        %377 = sbr.rel (%p375) target = $region40
      $region39: #{tpu_custom_call.1} parent=11 // pred_region
        _
      $region40: #{tpu_custom_call.1} parent=11 // pred_fallthru
        _
      // Predicated region
      $region41: #{tpu_custom_call.1} parent=11 // pred_check
        %p378 = pneg %p295
      $region42: #{tpu_custom_call.1} parent=11 // pred_check_branch
        %380 = sbr.rel (%p378) target = $region44
      $region43: #{tpu_custom_call.1} parent=11 // pred_region
        _
      $region44: #{tpu_custom_call.1} parent=11 // pred_fallthru
        _
      // Predicated region
      $region45: #{tpu_custom_call.1} parent=11 // pred_check
        %p381 = pneg %p316
      $region46: #{tpu_custom_call.1} parent=11 // pred_check_branch
        %383 = sbr.rel (%p381) target = $region48
      $region47: #{tpu_custom_call.1} parent=11 // pred_region
        _
      $region48: #{tpu_custom_call.1} parent=11 // pred_fallthru
        _
    $region12: #{tpu_custom_call.1} parent=5 // pred_fallthru
      _
    %p384 = scmp.lt.s32.totalorder %s23, 2
    // Predicated region
    $region49: #{tpu_custom_call.1} parent=5 // pred_check
      %p385 = pneg %p384
    $region50: #{tpu_custom_call.1} parent=5 // pred_check_branch
      %387 = sbr.rel (%p385) target = $region52
    $region51: #{tpu_custom_call.1} parent=5 // pred_region
      // Predicated region
      $region53: #{tpu_custom_call.1} parent=51 // pred_check
        %p388 = pneg %p43
      $region54: #{tpu_custom_call.1} parent=51 // pred_check_branch
        %390 = sbr.rel (%p388) target = $region56
      $region55: #{tpu_custom_call.1} parent=51 // pred_region
        %s391 = smul.u32 32, %s23
        %p392 = scmp.lt.s32.totalorder %s391, 63
        %s393 = scalar_select %p392, %s391, 63
        %s394 = smul.addr %s393, 8
        %s395 = scalar_lea.vmem %s0, %s394
        %s396 = smul.u32 32, %s23
      $region56: #{tpu_custom_call.1} parent=51 // pred_fallthru
        _
      // Predicated region
      $region57: #{tpu_custom_call.1} parent=51 // pred_check
        %p397 = pneg %p69
      $region58: #{tpu_custom_call.1} parent=51 // pred_check_branch
        %399 = sbr.rel (%p397) target = $region60
      $region59: #{tpu_custom_call.1} parent=51 // pred_region
        %s400 = smul.u32 32, %s23
        %p401 = scmp.lt.s32.totalorder %s400, 63
        %s402 = scalar_select %p401, %s400, 63
        %s403 = smul.addr %s402, 8
        %s404 = scalar_lea.vmem %s1, %s403
        %s405 = smul.u32 32, %s23
      $region60: #{tpu_custom_call.1} parent=51 // pred_fallthru
        _
      // Predicated region
      $region61: #{tpu_custom_call.1} parent=51 // pred_check
        %p406 = pneg %p95
      $region62: #{tpu_custom_call.1} parent=51 // pred_check_branch
        %408 = sbr.rel (%p406) target = $region64
      $region63: #{tpu_custom_call.1} parent=51 // pred_region
        %s409 = smul.u32 32, %s23
        %p410 = scmp.lt.s32.totalorder %s409, 63
        %s411 = scalar_select %p410, %s409, 63
        %s412 = smul.addr %s411, 8
        %s413 = scalar_lea.vmem %s2, %s412
        %s414 = smul.u32 32, %s23
      $region64: #{tpu_custom_call.1} parent=51 // pred_fallthru
        _
      // Predicated region
      $region65: #{tpu_custom_call.1} parent=51 // pred_check
        %p415 = pneg %p121
      $region66: #{tpu_custom_call.1} parent=51 // pred_check_branch
        %417 = sbr.rel (%p415) target = $region68
      $region67: #{tpu_custom_call.1} parent=51 // pred_region
        %s418 = smul.u32 32, %s23
        %p419 = scmp.lt.s32.totalorder %s418, 63
        %s420 = scalar_select %p419, %s418, 63
        %s421 = smul.addr %s420, 8
        %s422 = scalar_lea.vmem %s3, %s421
        %s423 = smul.u32 32, %s23
      $region68: #{tpu_custom_call.1} parent=51 // pred_fallthru
        _
    $region52: #{tpu_custom_call.1} parent=5 // pred_fallthru
      _
    %p424 = scmp.le.s32.totalorder 1, %s23
    %p425 = scmp.lt.s32.totalorder %s23, 3
    %p426 = pnand %p424, %p425
    %p427 = pneg %p426
    // Predicated region
    $region69: #{tpu_custom_call.1} parent=5 // pred_check
      _
    $region70: #{tpu_custom_call.1} parent=5 // pred_check_branch
      %429 = sbr.rel (%p426) target = $region72
    $region71: #{tpu_custom_call.1} parent=5 // pred_region
      %s430 = ssub.s32 %s23, 1
      %s431 = smul.u32 32, %s28
      %p432 = scmp.lt.s32.totalorder %s431, 63
      %s433 = scalar_select %p432, %s431, 63
      %s434 = smul.addr %s433, 8
      %s435 = scalar_lea.vmem %s0, %s434
      %p436 = pneg %p49
      %p437 = pneg %p46
      %s438 = smul.u32 32, %s28
      %p439 = scmp.lt.s32.totalorder %s438, 63
      %s440 = scalar_select %p439, %s438, 63
      %s441 = smul.addr %s440, 8
      %s442 = scalar_lea.vmem %s1, %s441
      %p443 = pneg %p75
      %p444 = pneg %p72
      %s445 = smul.u32 32, %s28
      %p446 = scmp.lt.s32.totalorder %s445, 63
      %s447 = scalar_select %p446, %s445, 63
      %s448 = smul.addr %s447, 8
      %s449 = scalar_lea.vmem %s2, %s448
      %p450 = pneg %p101
      %p451 = pneg %p98
      %s452 = smul.u32 32, %s28
      %p453 = scmp.lt.s32.totalorder %s452, 63
      %s454 = scalar_select %p453, %s452, 63
      %s455 = smul.addr %s454, 8
      %s456 = scalar_lea.vmem %s3, %s455
      %p457 = pneg %p127
      %p458 = pneg %p124
      %p459 = pneg %p148
      %p460 = pneg %p145
      %p461 = pneg %p169
      %p462 = pneg %p166
      %p463 = pneg %p190
      %p464 = pneg %p187
      %p465 = pneg %p211
      %p466 = pneg %p208
      %p467 = pneg %p232
      %p468 = pneg %p229
      %p469 = pneg %p253
      %p470 = pneg %p250
      %p471 = pneg %p274
      %p472 = pneg %p271
      %p473 = pneg %p295
      %p474 = pneg %p292
      %p475 = pneg %p316
      %p476 = pneg %p313
      %p477 = pneg %p342
      %p478 = pneg %p339
      %s479 = smul.u32 32, %s28
      %p480 = scmp.lt.s32.totalorder %s479, 63
      %s481 = scalar_select %p480, %s479, 63
      %s482 = smul.addr %s481, 8
      %s483 = scalar_lea.vmem %s13, %s482
      %s484 = smul.u32 32, %s28
      %p485 = scmp.lt.s32.totalorder %s484, 63
      %s486 = scalar_select %p485, %s484, 63
      %s487 = smul.addr %s486, 8
      %s488 = scalar_lea.vmem %s0, %s487
      %s489 = smul.u32 32, %s28
      %s490 = smul.u32 32, %s28
      %p491 = scmp.lt.s32.totalorder %s490, 63
      %s492 = scalar_select %p491, %s490, 63
      %s493 = smul.addr %s492, 8
      %s494 = scalar_lea.vmem %s1, %s493
      %s495 = smul.u32 32, %s28
      %s496 = smul.u32 32, %s28
      %p497 = scmp.lt.s32.totalorder %s496, 63
      %s498 = scalar_select %p497, %s496, 63
      %s499 = smul.addr %s498, 8
      %s500 = scalar_lea.vmem %s2, %s499
      %s501 = smul.u32 32, %s28
      %s502 = smul.u32 32, %s28
      %p503 = scmp.lt.s32.totalorder %s502, 63
      %s504 = scalar_select %p503, %s502, 63
      %s505 = smul.addr %s504, 8
      %s506 = scalar_lea.vmem %s3, %s505
      %s507 = smul.u32 32, %s28
      %s508 = smul.u32 32, %s28
      %p509 = scmp.lt.s32.totalorder %s508, 63
      %s510 = scalar_select %p509, %s508, 63
      %s511 = smul.addr %s510, 8
      %s512 = scalar_lea.vmem %s13, %s511
      %s513 = smul.u32 32, %s28
      %v514 = vld [vmem:[%s4] sm:$0x1]
      %v515 = vld [vmem:[#allocation2] sm:$0x1]
      %v516 = vld [vmem:[%s6] sm:$0x1]
      %v517 = vld [vmem:[%s7] sm:$0xff]
      %v518 = vld [vmem:[%s7 + $0x8] sm:$0xff]
      %v519 = vld [vmem:[%s8] sm:$0x1]
      %v520 = vld [vmem:[%s9] sm:$0xff]
      %v521 = vld [vmem:[%s9 + $0x8] sm:$0xff]
      %v522 = vld [vmem:[%s9 + $0x10] sm:$0xff]
      %v523 = vld [vmem:[%s9 + $0x18] sm:$0xff]
      %v524 = vld [vmem:[%s10] sm:$0x1]
      %v525 = vld [vmem:[%s11] sm:$0x1]
      %v526 = vld [vmem:[#allocation3] sm:$0x1]
      %v527 = vld [vmem:[%s488] sm:$0xff]
      %v528 = vld [vmem:[%s488 + $0x8] sm:$0xff]
      %v529 = vld [vmem:[%s488 + $0x10] sm:$0xff]
      %v530 = vld [vmem:[%s488 + $0x18] sm:$0xff]
      %v531 = vld [vmem:[%s488 + $0x20] sm:$0xff]
      %v532 = vld [vmem:[%s488 + $0x28] sm:$0xff]
      %v533 = vld [vmem:[%s488 + $0x30] sm:$0xff]
      %v534 = vld [vmem:[%s488 + $0x38] sm:$0xff]
      %v535 = vld [vmem:[%s488 + $0x40] sm:$0xff]
      %v536 = vld [vmem:[%s488 + $0x48] sm:$0xff]
      %v537 = vld [vmem:[%s488 + $0x50] sm:$0xff]
      %v538 = vld [vmem:[%s488 + $0x58] sm:$0xff]
      %v539 = vld [vmem:[%s488 + $0x60] sm:$0xff]
      %v540 = vld [vmem:[%s488 + $0x68] sm:$0xff]
      %v541 = vld [vmem:[%s488 + $0x70] sm:$0xff]
      %v542 = vld [vmem:[%s488 + $0x78] sm:$0xff]
      %v543 = vld [vmem:[%s488 + $0x80] sm:$0xff]
      %v544 = vld [vmem:[%s488 + $0x88] sm:$0xff]
      %v545 = vld [vmem:[%s488 + $0x90] sm:$0xff]
      %v546 = vld [vmem:[%s488 + $0x98] sm:$0xff]
      %v547 = vld [vmem:[%s488 + $0xa0] sm:$0xff]
      %v548 = vld [vmem:[%s488 + $0xa8] sm:$0xff]
      %v549 = vld [vmem:[%s488 + $0xb0] sm:$0xff]
      %v550 = vld [vmem:[%s488 + $0xb8] sm:$0xff]
      %v551 = vld [vmem:[%s488 + $0xc0] sm:$0xff]
      %v552 = vld [vmem:[%s488 + $0xc8] sm:$0xff]
      %v553 = vld [vmem:[%s488 + $0xd0] sm:$0xff]
      %v554 = vld [vmem:[%s488 + $0xd8] sm:$0xff]
      %v555 = vld [vmem:[%s488 + $0xe0] sm:$0xff]
      %v556 = vld [vmem:[%s488 + $0xe8] sm:$0xff]
      %v557 = vld [vmem:[%s488 + $0xf0] sm:$0xff]
      %v558 = vld [vmem:[%s488 + $0xf8] sm:$0xff]
      %v559 = vld [vmem:[%s500] sm:$0xff]
      %v560 = vld [vmem:[%s500 + $0x8] sm:$0xff]
      %v561 = vld [vmem:[%s500 + $0x10] sm:$0xff]
      %v562 = vld [vmem:[%s500 + $0x18] sm:$0xff]
      %v563 = vld [vmem:[%s500 + $0x20] sm:$0xff]
      %v564 = vld [vmem:[%s500 + $0x28] sm:$0xff]
      %v565 = vld [vmem:[%s500 + $0x30] sm:$0xff]
      %v566 = vld [vmem:[%s500 + $0x38] sm:$0xff]
      %v567 = vld [vmem:[%s500 + $0x40] sm:$0xff]
      %v568 = vld [vmem:[%s500 + $0x48] sm:$0xff]
      %v569 = vld [vmem:[%s500 + $0x50] sm:$0xff]
      %v570 = vld [vmem:[%s500 + $0x58] sm:$0xff]
      %v571 = vld [vmem:[%s500 + $0x60] sm:$0xff]
      %v572 = vld [vmem:[%s500 + $0x68] sm:$0xff]
      %v573 = vld [vmem:[%s500 + $0x70] sm:$0xff]
      %v574 = vld [vmem:[%s500 + $0x78] sm:$0xff]
      %v575 = vld [vmem:[%s500 + $0x80] sm:$0xff]
      %v576 = vld [vmem:[%s500 + $0x88] sm:$0xff]
      %v577 = vld [vmem:[%s500 + $0x90] sm:$0xff]
      %v578 = vld [vmem:[%s500 + $0x98] sm:$0xff]
      %v579 = vld [vmem:[%s500 + $0xa0] sm:$0xff]
      %v580 = vld [vmem:[%s500 + $0xa8] sm:$0xff]
      %v581 = vld [vmem:[%s500 + $0xb0] sm:$0xff]
      %v582 = vld [vmem:[%s500 + $0xb8] sm:$0xff]
      %v583 = vld [vmem:[%s500 + $0xc0] sm:$0xff]
      %v584 = vld [vmem:[%s500 + $0xc8] sm:$0xff]
      %v585 = vld [vmem:[%s500 + $0xd0] sm:$0xff]
      %v586 = vld [vmem:[%s500 + $0xd8] sm:$0xff]
      %v587 = vld [vmem:[%s500 + $0xe0] sm:$0xff]
      %v588 = vld [vmem:[%s500 + $0xe8] sm:$0xff]
      %v589 = vld [vmem:[%s500 + $0xf0] sm:$0xff]
      %v590 = vld [vmem:[%s500 + $0xf8] sm:$0xff]
      %v592 = vlaneseq
      %v593 = vshrl.u32 %v592, 7
      %v594 = vsub.s32 0, %v593
      %v595 = vrot.slane %v514, %v594
      %v597 = vmul.f32 %v527, %v595
      %v598 = vmul.f32 %v528, %v595
      %v599 = vmul.f32 %v529, %v595
      %v600 = vmul.f32 %v530, %v595
      %v601 = vmul.f32 %v531, %v595
      %v602 = vmul.f32 %v532, %v595
      %v603 = vmul.f32 %v533, %v595
      %v604 = vmul.f32 %v534, %v595
      %v605 = vmul.f32 %v535, %v595
      %v606 = vmul.f32 %v536, %v595
      %v607 = vmul.f32 %v537, %v595
      %v608 = vmul.f32 %v538, %v595
      %v609 = vmul.f32 %v539, %v595
      %v610 = vmul.f32 %v540, %v595
      %v611 = vmul.f32 %v541, %v595
      %v612 = vmul.f32 %v542, %v595
      %v613 = vmul.f32 %v543, %v595
      %v614 = vmul.f32 %v544, %v595
      %v615 = vmul.f32 %v545, %v595
      %v616 = vmul.f32 %v546, %v595
      %v617 = vmul.f32 %v547, %v595
      %v618 = vmul.f32 %v548, %v595
      %v619 = vmul.f32 %v549, %v595
      %v620 = vmul.f32 %v550, %v595
      %v621 = vmul.f32 %v551, %v595
      %v622 = vmul.f32 %v552, %v595
      %v623 = vmul.f32 %v553, %v595
      %v624 = vmul.f32 %v554, %v595
      %v625 = vmul.f32 %v555, %v595
      %v626 = vmul.f32 %v556, %v595
      %v627 = vmul.f32 %v557, %v595
      %v628 = vmul.f32 %v558, %v595
      %vm629 = vcmask 130048
      %v630 = vsel %vm629, %v597, 0.0
      %631 = vadd.xlane.f32.xlu0 %v630
      %v632 = vpop.xlane.xlu0 %631
      %v633 = vsel %vm629, %v598, 0.0
      %634 = vadd.xlane.f32.xlu0 %v633
      %v635 = vpop.xlane.xlu0 %634
      %v636 = vsel %vm629, %v599, 0.0
      %637 = vadd.xlane.f32.xlu0 %v636
      %v638 = vpop.xlane.xlu0 %637
      %v639 = vsel %vm629, %v600, 0.0
      %640 = vadd.xlane.f32.xlu0 %v639
      %v641 = vpop.xlane.xlu0 %640
      %v642 = vsel %vm629, %v601, 0.0
      %643 = vadd.xlane.f32.xlu0 %v642
      %v644 = vpop.xlane.xlu0 %643
      %v645 = vsel %vm629, %v602, 0.0
      %646 = vadd.xlane.f32.xlu0 %v645
      %v647 = vpop.xlane.xlu0 %646
      %v648 = vsel %vm629, %v603, 0.0
      %649 = vadd.xlane.f32.xlu0 %v648
      %v650 = vpop.xlane.xlu0 %649
      %v651 = vsel %vm629, %v604, 0.0
      %652 = vadd.xlane.f32.xlu0 %v651
      %v653 = vpop.xlane.xlu0 %652
      %v654 = vsel %vm629, %v605, 0.0
      %655 = vadd.xlane.f32.xlu0 %v654
      %v656 = vpop.xlane.xlu0 %655
      %v657 = vsel %vm629, %v606, 0.0
      %658 = vadd.xlane.f32.xlu0 %v657
      %v659 = vpop.xlane.xlu0 %658
      %v660 = vsel %vm629, %v607, 0.0
      %661 = vadd.xlane.f32.xlu0 %v660
      %v662 = vpop.xlane.xlu0 %661
      %v663 = vsel %vm629, %v608, 0.0
      %664 = vadd.xlane.f32.xlu0 %v663
      %v665 = vpop.xlane.xlu0 %664
      %v666 = vsel %vm629, %v609, 0.0
      %667 = vadd.xlane.f32.xlu0 %v666
      %v668 = vpop.xlane.xlu0 %667
      %v669 = vsel %vm629, %v610, 0.0
      %670 = vadd.xlane.f32.xlu0 %v669
      %v671 = vpop.xlane.xlu0 %670
      %v672 = vsel %vm629, %v611, 0.0
      %673 = vadd.xlane.f32.xlu0 %v672
      %v674 = vpop.xlane.xlu0 %673
      %v675 = vsel %vm629, %v612, 0.0
      %676 = vadd.xlane.f32.xlu0 %v675
      %v677 = vpop.xlane.xlu0 %676
      %v678 = vsel %vm629, %v613, 0.0
      %679 = vadd.xlane.f32.xlu0 %v678
      %v680 = vpop.xlane.xlu0 %679
      %v681 = vsel %vm629, %v614, 0.0
      %682 = vadd.xlane.f32.xlu0 %v681
      %v683 = vpop.xlane.xlu0 %682
      %v684 = vsel %vm629, %v615, 0.0
      %685 = vadd.xlane.f32.xlu0 %v684
      %v686 = vpop.xlane.xlu0 %685
      %v687 = vsel %vm629, %v616, 0.0
      %688 = vadd.xlane.f32.xlu0 %v687
      %v689 = vpop.xlane.xlu0 %688
      %v690 = vsel %vm629, %v617, 0.0
      %691 = vadd.xlane.f32.xlu0 %v690
      %v692 = vpop.xlane.xlu0 %691
      %v693 = vsel %vm629, %v618, 0.0
      %694 = vadd.xlane.f32.xlu0 %v693
      %v695 = vpop.xlane.xlu0 %694
      %v696 = vsel %vm629, %v619, 0.0
      %697 = vadd.xlane.f32.xlu0 %v696
      %v698 = vpop.xlane.xlu0 %697
      %v699 = vsel %vm629, %v620, 0.0
      %700 = vadd.xlane.f32.xlu0 %v699
      %v701 = vpop.xlane.xlu0 %700
      %v702 = vsel %vm629, %v621, 0.0
      %703 = vadd.xlane.f32.xlu0 %v702
      %v704 = vpop.xlane.xlu0 %703
      %v705 = vsel %vm629, %v622, 0.0
      %706 = vadd.xlane.f32.xlu0 %v705
      %v707 = vpop.xlane.xlu0 %706
      %v708 = vsel %vm629, %v623, 0.0
      %709 = vadd.xlane.f32.xlu0 %v708
      %v710 = vpop.xlane.xlu0 %709
      %v711 = vsel %vm629, %v624, 0.0
      %712 = vadd.xlane.f32.xlu0 %v711
      %v713 = vpop.xlane.xlu0 %712
      %v714 = vsel %vm629, %v625, 0.0
      %715 = vadd.xlane.f32.xlu0 %v714
      %v716 = vpop.xlane.xlu0 %715
      %v717 = vsel %vm629, %v626, 0.0
      %718 = vadd.xlane.f32.xlu0 %v717
      %v719 = vpop.xlane.xlu0 %718
      %v720 = vsel %vm629, %v627, 0.0
      %721 = vadd.xlane.f32.xlu0 %v720
      %v722 = vpop.xlane.xlu0 %721
      %v723 = vsel %vm629, %v628, 0.0
      %724 = vadd.xlane.f32.xlu0 %v723
      %v725 = vpop.xlane.xlu0 %724
      %v727 = vlaneseq
      %v728 = vshrl.u32 %v727, 7
      %v729 = vsub.s32 0, %v728
      %v730 = vrot.slane %v515, %v729
      %v732 = vadd.f32 %v632, %v730
      %v733 = vadd.f32 %v635, %v730
      %v734 = vadd.f32 %v638, %v730
      %v735 = vadd.f32 %v641, %v730
      %v736 = vadd.f32 %v644, %v730
      %v737 = vadd.f32 %v647, %v730
      %v738 = vadd.f32 %v650, %v730
      %v739 = vadd.f32 %v653, %v730
      %v740 = vadd.f32 %v656, %v730
      %v741 = vadd.f32 %v659, %v730
      %v742 = vadd.f32 %v662, %v730
      %v743 = vadd.f32 %v665, %v730
      %v744 = vadd.f32 %v668, %v730
      %v745 = vadd.f32 %v671, %v730
      %v746 = vadd.f32 %v674, %v730
      %v747 = vadd.f32 %v677, %v730
      %v748 = vadd.f32 %v680, %v730
      %v749 = vadd.f32 %v683, %v730
      %v750 = vadd.f32 %v686, %v730
      %v751 = vadd.f32 %v689, %v730
      %v752 = vadd.f32 %v692, %v730
      %v753 = vadd.f32 %v695, %v730
      %v754 = vadd.f32 %v698, %v730
      %v755 = vadd.f32 %v701, %v730
      %v756 = vadd.f32 %v704, %v730
      %v757 = vadd.f32 %v707, %v730
      %v758 = vadd.f32 %v710, %v730
      %v759 = vadd.f32 %v713, %v730
      %v760 = vadd.f32 %v716, %v730
      %v761 = vadd.f32 %v719, %v730
      %v762 = vadd.f32 %v722, %v730
      %v763 = vadd.f32 %v725, %v730
      %v764 = vld [vmem:[%s494] sm:$0xff]
      %v765 = vld [vmem:[%s494 + $0x8] sm:$0xff]
      %v766 = vld [vmem:[%s494 + $0x10] sm:$0xff]
      %v767 = vld [vmem:[%s494 + $0x18] sm:$0xff]
      %v768 = vld [vmem:[%s494 + $0x20] sm:$0xff]
      %v769 = vld [vmem:[%s494 + $0x28] sm:$0xff]
      %v770 = vld [vmem:[%s494 + $0x30] sm:$0xff]
      %v771 = vld [vmem:[%s494 + $0x38] sm:$0xff]
      %v772 = vld [vmem:[%s494 + $0x40] sm:$0xff]
      %v773 = vld [vmem:[%s494 + $0x48] sm:$0xff]
      %v774 = vld [vmem:[%s494 + $0x50] sm:$0xff]
      %v775 = vld [vmem:[%s494 + $0x58] sm:$0xff]
      %v776 = vld [vmem:[%s494 + $0x60] sm:$0xff]
      %v777 = vld [vmem:[%s494 + $0x68] sm:$0xff]
      %v778 = vld [vmem:[%s494 + $0x70] sm:$0xff]
      %v779 = vld [vmem:[%s494 + $0x78] sm:$0xff]
      %v780 = vld [vmem:[%s494 + $0x80] sm:$0xff]
      %v781 = vld [vmem:[%s494 + $0x88] sm:$0xff]
      %v782 = vld [vmem:[%s494 + $0x90] sm:$0xff]
      %v783 = vld [vmem:[%s494 + $0x98] sm:$0xff]
      %v784 = vld [vmem:[%s494 + $0xa0] sm:$0xff]
      %v785 = vld [vmem:[%s494 + $0xa8] sm:$0xff]
      %v786 = vld [vmem:[%s494 + $0xb0] sm:$0xff]
      %v787 = vld [vmem:[%s494 + $0xb8] sm:$0xff]
      %v788 = vld [vmem:[%s494 + $0xc0] sm:$0xff]
      %v789 = vld [vmem:[%s494 + $0xc8] sm:$0xff]
      %v790 = vld [vmem:[%s494 + $0xd0] sm:$0xff]
      %v791 = vld [vmem:[%s494 + $0xd8] sm:$0xff]
      %v792 = vld [vmem:[%s494 + $0xe0] sm:$0xff]
      %v793 = vld [vmem:[%s494 + $0xe8] sm:$0xff]
      %v794 = vld [vmem:[%s494 + $0xf0] sm:$0xff]
      %v795 = vld [vmem:[%s494 + $0xf8] sm:$0xff]
      %v797 = vlaneseq
      %v798 = vshrl.u32 %v797, 7
      %v799 = vsub.s32 0, %v798
      %v800 = vrot.slane %v516, %v799
      %v802 = vmul.f32 %v764, %v800
      %v803 = vmul.f32 %v765, %v800
      %v804 = vmul.f32 %v766, %v800
      %v805 = vmul.f32 %v767, %v800
      %v806 = vmul.f32 %v768, %v800
      %v807 = vmul.f32 %v769, %v800
      %v808 = vmul.f32 %v770, %v800
      %v809 = vmul.f32 %v771, %v800
      %v810 = vmul.f32 %v772, %v800
      %v811 = vmul.f32 %v773, %v800
      %v812 = vmul.f32 %v774, %v800
      %v813 = vmul.f32 %v775, %v800
      %v814 = vmul.f32 %v776, %v800
      %v815 = vmul.f32 %v777, %v800
      %v816 = vmul.f32 %v778, %v800
      %v817 = vmul.f32 %v779, %v800
      %v818 = vmul.f32 %v780, %v800
      %v819 = vmul.f32 %v781, %v800
      %v820 = vmul.f32 %v782, %v800
      %v821 = vmul.f32 %v783, %v800
      %v822 = vmul.f32 %v784, %v800
      %v823 = vmul.f32 %v785, %v800
      %v824 = vmul.f32 %v786, %v800
      %v825 = vmul.f32 %v787, %v800
      %v826 = vmul.f32 %v788, %v800
      %v827 = vmul.f32 %v789, %v800
      %v828 = vmul.f32 %v790, %v800
      %v829 = vmul.f32 %v791, %v800
      %v830 = vmul.f32 %v792, %v800
      %v831 = vmul.f32 %v793, %v800
      %v832 = vmul.f32 %v794, %v800
      %v833 = vmul.f32 %v795, %v800
      %vm834 = vcmask 64512
      %v835 = vsel %vm834, %v802, 0.0
      %836 = vadd.xlane.f32.xlu0 %v835
      %v837 = vpop.xlane.xlu0 %836
      %v838 = vsel %vm834, %v803, 0.0
      %839 = vadd.xlane.f32.xlu0 %v838
      %v840 = vpop.xlane.xlu0 %839
      %v841 = vsel %vm834, %v804, 0.0
      %842 = vadd.xlane.f32.xlu0 %v841
      %v843 = vpop.xlane.xlu0 %842
      %v844 = vsel %vm834, %v805, 0.0
      %845 = vadd.xlane.f32.xlu0 %v844
      %v846 = vpop.xlane.xlu0 %845
      %v847 = vsel %vm834, %v806, 0.0
      %848 = vadd.xlane.f32.xlu0 %v847
      %v849 = vpop.xlane.xlu0 %848
      %v850 = vsel %vm834, %v807, 0.0
      %851 = vadd.xlane.f32.xlu0 %v850
      %v852 = vpop.xlane.xlu0 %851
      %v853 = vsel %vm834, %v808, 0.0
      %854 = vadd.xlane.f32.xlu0 %v853
      %v855 = vpop.xlane.xlu0 %854
      %v856 = vsel %vm834, %v809, 0.0
      %857 = vadd.xlane.f32.xlu0 %v856
      %v858 = vpop.xlane.xlu0 %857
      %v859 = vsel %vm834, %v810, 0.0
      %860 = vadd.xlane.f32.xlu0 %v859
      %v861 = vpop.xlane.xlu0 %860
      %v862 = vsel %vm834, %v811, 0.0
      %863 = vadd.xlane.f32.xlu0 %v862
      %v864 = vpop.xlane.xlu0 %863
      %v865 = vsel %vm834, %v812, 0.0
      %866 = vadd.xlane.f32.xlu0 %v865
      %v867 = vpop.xlane.xlu0 %866
      %v868 = vsel %vm834, %v813, 0.0
      %869 = vadd.xlane.f32.xlu0 %v868
      %v870 = vpop.xlane.xlu0 %869
      %v871 = vsel %vm834, %v814, 0.0
      %872 = vadd.xlane.f32.xlu0 %v871
      %v873 = vpop.xlane.xlu0 %872
      %v874 = vsel %vm834, %v815, 0.0
      %875 = vadd.xlane.f32.xlu0 %v874
      %v876 = vpop.xlane.xlu0 %875
      %v877 = vsel %vm834, %v816, 0.0
      %878 = vadd.xlane.f32.xlu0 %v877
      %v879 = vpop.xlane.xlu0 %878
      %v880 = vsel %vm834, %v817, 0.0
      %881 = vadd.xlane.f32.xlu0 %v880
      %v882 = vpop.xlane.xlu0 %881
      %v883 = vsel %vm834, %v818, 0.0
      %884 = vadd.xlane.f32.xlu0 %v883
      %v885 = vpop.xlane.xlu0 %884
      %v886 = vsel %vm834, %v819, 0.0
      %887 = vadd.xlane.f32.xlu0 %v886
      %v888 = vpop.xlane.xlu0 %887
      %v889 = vsel %vm834, %v820, 0.0
      %890 = vadd.xlane.f32.xlu0 %v889
      %v891 = vpop.xlane.xlu0 %890
      %v892 = vsel %vm834, %v821, 0.0
      %893 = vadd.xlane.f32.xlu0 %v892
      %v894 = vpop.xlane.xlu0 %893
      %v895 = vsel %vm834, %v822, 0.0
      %896 = vadd.xlane.f32.xlu0 %v895
      %v897 = vpop.xlane.xlu0 %896
      %v898 = vsel %vm834, %v823, 0.0
      %899 = vadd.xlane.f32.xlu0 %v898
      %v900 = vpop.xlane.xlu0 %899
      %v901 = vsel %vm834, %v824, 0.0
      %902 = vadd.xlane.f32.xlu0 %v901
      %v903 = vpop.xlane.xlu0 %902
      %v904 = vsel %vm834, %v825, 0.0
      %905 = vadd.xlane.f32.xlu0 %v904
      %v906 = vpop.xlane.xlu0 %905
      %v907 = vsel %vm834, %v826, 0.0
      %908 = vadd.xlane.f32.xlu0 %v907
      %v909 = vpop.xlane.xlu0 %908
      %v910 = vsel %vm834, %v827, 0.0
      %911 = vadd.xlane.f32.xlu0 %v910
      %v912 = vpop.xlane.xlu0 %911
      %v913 = vsel %vm834, %v828, 0.0
      %914 = vadd.xlane.f32.xlu0 %v913
      %v915 = vpop.xlane.xlu0 %914
      %v916 = vsel %vm834, %v829, 0.0
      %917 = vadd.xlane.f32.xlu0 %v916
      %v918 = vpop.xlane.xlu0 %917
      %v919 = vsel %vm834, %v830, 0.0
      %920 = vadd.xlane.f32.xlu0 %v919
      %v921 = vpop.xlane.xlu0 %920
      %v922 = vsel %vm834, %v831, 0.0
      %923 = vadd.xlane.f32.xlu0 %v922
      %v924 = vpop.xlane.xlu0 %923
      %v925 = vsel %vm834, %v832, 0.0
      %926 = vadd.xlane.f32.xlu0 %v925
      %v927 = vpop.xlane.xlu0 %926
      %v928 = vsel %vm834, %v833, 0.0
      %929 = vadd.xlane.f32.xlu0 %v928
      %v930 = vpop.xlane.xlu0 %929
      %v931 = vadd.f32 %v732, %v837
      %v932 = vadd.f32 %v733, %v840
      %v933 = vadd.f32 %v734, %v843
      %v934 = vadd.f32 %v735, %v846
      %v935 = vadd.f32 %v736, %v849
      %v936 = vadd.f32 %v737, %v852
      %v937 = vadd.f32 %v738, %v855
      %v938 = vadd.f32 %v739, %v858
      %v939 = vadd.f32 %v740, %v861
      %v940 = vadd.f32 %v741, %v864
      %v941 = vadd.f32 %v742, %v867
      %v942 = vadd.f32 %v743, %v870
      %v943 = vadd.f32 %v744, %v873
      %v944 = vadd.f32 %v745, %v876
      %v945 = vadd.f32 %v746, %v879
      %v946 = vadd.f32 %v747, %v882
      %v947 = vadd.f32 %v748, %v885
      %v948 = vadd.f32 %v749, %v888
      %v949 = vadd.f32 %v750, %v891
      %v950 = vadd.f32 %v751, %v894
      %v951 = vadd.f32 %v752, %v897
      %v952 = vadd.f32 %v753, %v900
      %v953 = vadd.f32 %v754, %v903
      %v954 = vadd.f32 %v755, %v906
      %v955 = vadd.f32 %v756, %v909
      %v956 = vadd.f32 %v757, %v912
      %v957 = vadd.f32 %v758, %v915
      %v958 = vadd.f32 %v759, %v918
      %v959 = vadd.f32 %v760, %v921
      %v960 = vadd.f32 %v761, %v924
      %v961 = vadd.f32 %v762, %v927
      %v962 = vadd.f32 %v763, %v930
      %v964 = vlaneseq
      %v965 = vshrl.u32 %v964, 7
      %v966 = vsub.s32 0, %v965
      %v967 = vrot.slane %v519, %v966
      %v970 = vsel %vm629, %v559, 0
      %v973 = vsel %vm629, %v560, 0
      %v976 = vsel %vm629, %v561, 0
      %v979 = vsel %vm629, %v562, 0
      %v982 = vsel %vm629, %v563, 0
      %v985 = vsel %vm629, %v564, 0
      %v988 = vsel %vm629, %v565, 0
      %v991 = vsel %vm629, %v566, 0
      %v994 = vsel %vm629, %v567, 0
      %v997 = vsel %vm629, %v568, 0
      %v1000 = vsel %vm629, %v569, 0
      %v1003 = vsel %vm629, %v570, 0
      %v1006 = vsel %vm629, %v571, 0
      %v1009 = vsel %vm629, %v572, 0
      %v1012 = vsel %vm629, %v573, 0
      %v1015 = vsel %vm629, %v574, 0
      %v1018 = vsel %vm629, %v575, 0
      %v1021 = vsel %vm629, %v576, 0
      %v1024 = vsel %vm629, %v577, 0
      %v1027 = vsel %vm629, %v578, 0
      %v1030 = vsel %vm629, %v579, 0
      %v1033 = vsel %vm629, %v580, 0
      %v1036 = vsel %vm629, %v581, 0
      %v1039 = vsel %vm629, %v582, 0
      %v1042 = vsel %vm629, %v583, 0
      %v1045 = vsel %vm629, %v584, 0
      %v1048 = vsel %vm629, %v585, 0
      %v1051 = vsel %vm629, %v586, 0
      %v1054 = vsel %vm629, %v587, 0
      %v1057 = vsel %vm629, %v588, 0
      %v1060 = vsel %vm629, %v589, 0
      %v1063 = vsel %vm629, %v590, 0
      %1065 = vmatprep.subr.mxu0 0.0
      %1066 = vmatpush1.msra.mxu0 0.0
      %1067 = vmatprep.subr.mxu0 0.0
      %1068 = vmatpush1.msra.mxu0 0.0
      %1069 = vmatprep.subr.mxu0 0.0
      %1070 = vmatpush1.msra.mxu0 0.0
      %1071 = vmatprep.subr.mxu0 0.0
      %1072 = vmatpush1.msra.mxu0 0.0
      %1073 = vmatprep.subr.mxu0 0.0
      %1074 = vmatpush1.msra.mxu0 0.0
      %1075 = vmatprep.subr.mxu0 0.0
      %1076 = vmatpush1.msra.mxu0 0.0
      %1077 = vmatprep.subr.mxu0 0.0
      %1078 = vmatpush1.msra.mxu0 0.0
      %1079 = vmatprep.subr.mxu0 0.0
      %1080 = vmatpush1.msra.mxu0 0.0
      %1081 = vmatprep.subr.mxu0 0.0
      %1082 = vmatpush1.msra.mxu0 0.0
      %1083 = vmatprep.subr.mxu0 0.0
      %1084 = vmatpush1.msra.mxu0 0.0
      %1085 = vmatprep.subr.mxu0 0.0
      %1086 = vmatpush1.msra.mxu0 0.0
      %1087 = vmatprep.subr.mxu0 0.0
      %1088 = vmatpush1.msra.mxu0 0.0
      %1089 = vmatprep.subr.mxu0 0.0
      %1090 = vmatpush1.msra.mxu0 0.0
      %1091 = vmatprep.subr.mxu0 0.0
      %1092 = vmatpush1.msra.mxu0 0.0
      %1093 = vmatprep.subr.mxu0 0.0
      %1094 = vmatpush1.msra.mxu0 %v518
      %1095 = vmatprep.subr.mxu0 0.0
      %1096 = vmatpush1.msra.mxu0 %v517
      %1097 = vmatprep.subr.mxu0 0.0
      %1098 = vmatpush2.msra.mxu0 0.0
      %1099 = vmatprep.subr.mxu0 0.0
      %1100 = vmatpush2.msra.mxu0 0.0
      %1101 = vmatprep.subr.mxu0 0.0
      %1102 = vmatpush2.msra.mxu0 0.0
      %1103 = vmatprep.subr.mxu0 0.0
      %1104 = vmatpush2.msra.mxu0 0.0
      %1105 = vmatprep.subr.mxu0 0.0
      %1106 = vmatpush2.msra.mxu0 0.0
      %1107 = vmatprep.subr.mxu0 0.0
      %1108 = vmatpush2.msra.mxu0 0.0
      %1109 = vmatprep.subr.mxu0 0.0
      %1110 = vmatpush2.msra.mxu0 0.0
      %1111 = vmatprep.subr.mxu0 0.0
      %1112 = vmatpush2.msra.mxu0 0.0
      %1113 = vmatprep.subr.mxu0 0.0
      %1114 = vmatpush2.msra.mxu0 0.0
      %1115 = vmatprep.subr.mxu0 0.0
      %1116 = vmatpush2.msra.mxu0 0.0
      %1117 = vmatprep.subr.mxu0 0.0
      %1118 = vmatpush2.msra.mxu0 0.0
      %1119 = vmatprep.subr.mxu0 0.0
      %1120 = vmatpush2.msra.mxu0 0.0
      %1121 = vmatprep.subr.mxu0 0.0
      %1122 = vmatpush2.msra.mxu0 0.0
      %1123 = vmatprep.subr.mxu0 0.0
      %1124 = vmatpush2.msra.mxu0 0.0
      %1125 = vmatprep.subr.mxu0 0.0
      %1126 = vmatpush2.msra.mxu0 0.0
      %1127 = vmatprep.subr.mxu0 0.0
      %1128 = vmatpush2.msra.mxu0 0.0
      %1129 = vmatprep.mubr.f32.mxu0 0.0
      %1130 = vmatmul.mubr.f32.gmra.mxu0 %v970
      %v1131 = vpop.f32.mrf.mxu0
      %v1132 = vadd.f32 %v967, %v1131
      %v1133 = vpop.f32.mrf.mxu0
      %1134 = vmatprep.mubr.f32.mxu0 0.0
      %1135 = vmatmul.mubr.f32.gmra.mxu0 %v973
      %v1136 = vpop.f32.mrf.mxu0
      %v1137 = vadd.f32 %v967, %v1136
      %v1138 = vpop.f32.mrf.mxu0
      %1139 = vmatprep.mubr.f32.mxu0 0.0
      %1140 = vmatmul.mubr.f32.gmra.mxu0 %v976
      %v1141 = vpop.f32.mrf.mxu0
      %v1142 = vadd.f32 %v967, %v1141
      %v1143 = vpop.f32.mrf.mxu0
      %1144 = vmatprep.mubr.f32.mxu0 0.0
      %1145 = vmatmul.mubr.f32.gmra.mxu0 %v979
      %v1146 = vpop.f32.mrf.mxu0
      %v1147 = vadd.f32 %v967, %v1146
      %v1148 = vpop.f32.mrf.mxu0
      %1149 = vmatprep.mubr.f32.mxu0 0.0
      %1150 = vmatmul.mubr.f32.gmra.mxu0 %v982
      %v1151 = vpop.f32.mrf.mxu0
      %v1152 = vadd.f32 %v967, %v1151
      %v1153 = vpop.f32.mrf.mxu0
      %1154 = vmatprep.mubr.f32.mxu0 0.0
      %1155 = vmatmul.mubr.f32.gmra.mxu0 %v985
      %v1156 = vpop.f32.mrf.mxu0
      %v1157 = vadd.f32 %v967, %v1156
      %v1158 = vpop.f32.mrf.mxu0
      %1159 = vmatprep.mubr.f32.mxu0 0.0
      %1160 = vmatmul.mubr.f32.gmra.mxu0 %v988
      %v1161 = vpop.f32.mrf.mxu0
      %v1162 = vadd.f32 %v967, %v1161
      %v1163 = vpop.f32.mrf.mxu0
      %1164 = vmatprep.mubr.f32.mxu0 0.0
      %1165 = vmatmul.mubr.f32.gmra.mxu0 %v991
      %v1166 = vpop.f32.mrf.mxu0
      %v1167 = vadd.f32 %v967, %v1166
      %v1168 = vpop.f32.mrf.mxu0
      %1169 = vmatprep.mubr.f32.mxu0 0.0
      %1170 = vmatmul.mubr.f32.gmra.mxu0 %v994
      %v1171 = vpop.f32.mrf.mxu0
      %v1172 = vadd.f32 %v967, %v1171
      %v1173 = vpop.f32.mrf.mxu0
      %1174 = vmatprep.mubr.f32.mxu0 0.0
      %1175 = vmatmul.mubr.f32.gmra.mxu0 %v997
      %v1176 = vpop.f32.mrf.mxu0
      %v1177 = vadd.f32 %v967, %v1176
      %v1178 = vpop.f32.mrf.mxu0
      %1179 = vmatprep.mubr.f32.mxu0 0.0
      %1180 = vmatmul.mubr.f32.gmra.mxu0 %v1000
      %v1181 = vpop.f32.mrf.mxu0
      %v1182 = vadd.f32 %v967, %v1181
      %v1183 = vpop.f32.mrf.mxu0
      %1184 = vmatprep.mubr.f32.mxu0 0.0
      %1185 = vmatmul.mubr.f32.gmra.mxu0 %v1003
      %v1186 = vpop.f32.mrf.mxu0
      %v1187 = vadd.f32 %v967, %v1186
      %v1188 = vpop.f32.mrf.mxu0
      %1189 = vmatprep.mubr.f32.mxu0 0.0
      %1190 = vmatmul.mubr.f32.gmra.mxu0 %v1006
      %v1191 = vpop.f32.mrf.mxu0
      %v1192 = vadd.f32 %v967, %v1191
      %v1193 = vpop.f32.mrf.mxu0
      %1194 = vmatprep.mubr.f32.mxu0 0.0
      %1195 = vmatmul.mubr.f32.gmra.mxu0 %v1009
      %v1196 = vpop.f32.mrf.mxu0
      %v1197 = vadd.f32 %v967, %v1196
      %v1198 = vpop.f32.mrf.mxu0
      %1199 = vmatprep.mubr.f32.mxu0 0.0
      %1200 = vmatmul.mubr.f32.gmra.mxu0 %v1012
      %v1201 = vpop.f32.mrf.mxu0
      %v1202 = vadd.f32 %v967, %v1201
      %v1203 = vpop.f32.mrf.mxu0
      %1204 = vmatprep.mubr.f32.mxu0 0.0
      %1205 = vmatmul.mubr.f32.gmra.mxu0 %v1015
      %v1206 = vpop.f32.mrf.mxu0
      %v1207 = vadd.f32 %v967, %v1206
      %v1208 = vpop.f32.mrf.mxu0
      %1209 = vmatprep.mubr.f32.mxu0 0.0
      %1210 = vmatmul.mubr.f32.gmra.mxu0 %v1018
      %v1211 = vpop.f32.mrf.mxu0
      %v1212 = vadd.f32 %v967, %v1211
      %v1213 = vpop.f32.mrf.mxu0
      %1214 = vmatprep.mubr.f32.mxu0 0.0
      %1215 = vmatmul.mubr.f32.gmra.mxu0 %v1021
      %v1216 = vpop.f32.mrf.mxu0
      %v1217 = vadd.f32 %v967, %v1216
      %v1218 = vpop.f32.mrf.mxu0
      %1219 = vmatprep.mubr.f32.mxu0 0.0
      %1220 = vmatmul.mubr.f32.gmra.mxu0 %v1024
      %v1221 = vpop.f32.mrf.mxu0
      %v1222 = vadd.f32 %v967, %v1221
      %v1223 = vpop.f32.mrf.mxu0
      %1224 = vmatprep.mubr.f32.mxu0 0.0
      %1225 = vmatmul.mubr.f32.gmra.mxu0 %v1027
      %v1226 = vpop.f32.mrf.mxu0
      %v1227 = vadd.f32 %v967, %v1226
      %v1228 = vpop.f32.mrf.mxu0
      %1229 = vmatprep.mubr.f32.mxu0 0.0
      %1230 = vmatmul.mubr.f32.gmra.mxu0 %v1030
      %v1231 = vpop.f32.mrf.mxu0
      %v1232 = vadd.f32 %v967, %v1231
      %v1233 = vpop.f32.mrf.mxu0
      %1234 = vmatprep.mubr.f32.mxu0 0.0
      %1235 = vmatmul.mubr.f32.gmra.mxu0 %v1033
      %v1236 = vpop.f32.mrf.mxu0
      %v1237 = vadd.f32 %v967, %v1236
      %v1238 = vpop.f32.mrf.mxu0
      %1239 = vmatprep.mubr.f32.mxu0 0.0
      %1240 = vmatmul.mubr.f32.gmra.mxu0 %v1036
      %v1241 = vpop.f32.mrf.mxu0
      %v1242 = vadd.f32 %v967, %v1241
      %v1243 = vpop.f32.mrf.mxu0
      %1244 = vmatprep.mubr.f32.mxu0 0.0
      %1245 = vmatmul.mubr.f32.gmra.mxu0 %v1039
      %v1246 = vpop.f32.mrf.mxu0
      %v1247 = vadd.f32 %v967, %v1246
      %v1248 = vpop.f32.mrf.mxu0
      %1249 = vmatprep.mubr.f32.mxu0 0.0
      %1250 = vmatmul.mubr.f32.gmra.mxu0 %v1042
      %v1251 = vpop.f32.mrf.mxu0
      %v1252 = vadd.f32 %v967, %v1251
      %v1253 = vpop.f32.mrf.mxu0
      %1254 = vmatprep.mubr.f32.mxu0 0.0
      %1255 = vmatmul.mubr.f32.gmra.mxu0 %v1045
      %v1256 = vpop.f32.mrf.mxu0
      %v1257 = vadd.f32 %v967, %v1256
      %v1258 = vpop.f32.mrf.mxu0
      %1259 = vmatprep.mubr.f32.mxu0 0.0
      %1260 = vmatmul.mubr.f32.gmra.mxu0 %v1048
      %v1261 = vpop.f32.mrf.mxu0
      %v1262 = vadd.f32 %v967, %v1261
      %v1263 = vpop.f32.mrf.mxu0
      %1264 = vmatprep.mubr.f32.mxu0 0.0
      %1265 = vmatmul.mubr.f32.gmra.mxu0 %v1051
      %v1266 = vpop.f32.mrf.mxu0
      %v1267 = vadd.f32 %v967, %v1266
      %v1268 = vpop.f32.mrf.mxu0
      %1269 = vmatprep.mubr.f32.mxu0 0.0
      %1270 = vmatmul.mubr.f32.gmra.mxu0 %v1054
      %v1271 = vpop.f32.mrf.mxu0
      %v1272 = vadd.f32 %v967, %v1271
      %v1273 = vpop.f32.mrf.mxu0
      %1274 = vmatprep.mubr.f32.mxu0 0.0
      %1275 = vmatmul.mubr.f32.gmra.mxu0 %v1057
      %v1276 = vpop.f32.mrf.mxu0
      %v1277 = vadd.f32 %v967, %v1276
      %v1278 = vpop.f32.mrf.mxu0
      %1279 = vmatprep.mubr.f32.mxu0 0.0
      %1280 = vmatmul.mubr.f32.gmra.mxu0 %v1060
      %v1281 = vpop.f32.mrf.mxu0
      %v1282 = vadd.f32 %v967, %v1281
      %v1283 = vpop.f32.mrf.mxu0
      %1284 = vmatprep.mubr.f32.mxu0 0.0
      %1285 = vmatmul.mubr.f32.gmra.mxu0 %v1063
      %v1286 = vpop.f32.mrf.mxu0
      %v1287 = vadd.f32 %v967, %v1286
      %v1288 = vpop.f32.mrf.mxu0
      %1289 = vdwg.mxu0
      %v1290 = vtanh.pop %v1132
      %v1291 = vtanh.pop %v1137
      %v1292 = vtanh.pop %v1142
      %v1293 = vtanh.pop %v1147
      %v1294 = vtanh.pop %v1152
      %v1295 = vtanh.pop %v1157
      %v1296 = vtanh.pop %v1162
      %v1297 = vtanh.pop %v1167
      %v1298 = vtanh.pop %v1172
      %v1299 = vtanh.pop %v1177
      %v1300 = vtanh.pop %v1182
      %v1301 = vtanh.pop %v1187
      %v1302 = vtanh.pop %v1192
      %v1303 = vtanh.pop %v1197
      %v1304 = vtanh.pop %v1202
      %v1305 = vtanh.pop %v1207
      %v1306 = vtanh.pop %v1212
      %v1307 = vtanh.pop %v1217
      %v1308 = vtanh.pop %v1222
      %v1309 = vtanh.pop %v1227
      %v1310 = vtanh.pop %v1232
      %v1311 = vtanh.pop %v1237
      %v1312 = vtanh.pop %v1242
      %v1313 = vtanh.pop %v1247
      %v1314 = vtanh.pop %v1252
      %v1315 = vtanh.pop %v1257
      %v1316 = vtanh.pop %v1262
      %v1317 = vtanh.pop %v1267
      %v1318 = vtanh.pop %v1272
      %v1319 = vtanh.pop %v1277
      %v1320 = vtanh.pop %v1282
      %v1321 = vtanh.pop %v1287
      %v1323 = vlaneseq
      %v1324 = vshrl.u32 %v1323, 7
      %v1325 = vsub.s32 0, %v1324
      %v1326 = vrot.slane %v524, %v1325
      %vm1328 = vcmask 261120
      %v1330 = vsel %vm1328, %v1290, 0
      %v1333 = vsel %vm1328, %v1291, 0
      %v1336 = vsel %vm1328, %v1292, 0
      %v1339 = vsel %vm1328, %v1293, 0
      %v1342 = vsel %vm1328, %v1294, 0
      %v1345 = vsel %vm1328, %v1295, 0
      %v1348 = vsel %vm1328, %v1296, 0
      %v1351 = vsel %vm1328, %v1297, 0
      %v1354 = vsel %vm1328, %v1298, 0
      %v1357 = vsel %vm1328, %v1299, 0
      %v1360 = vsel %vm1328, %v1300, 0
      %v1363 = vsel %vm1328, %v1301, 0
      %v1366 = vsel %vm1328, %v1302, 0
      %v1369 = vsel %vm1328, %v1303, 0
      %v1372 = vsel %vm1328, %v1304, 0
      %v1375 = vsel %vm1328, %v1305, 0
      %v1378 = vsel %vm1328, %v1306, 0
      %v1381 = vsel %vm1328, %v1307, 0
      %v1384 = vsel %vm1328, %v1308, 0
      %v1387 = vsel %vm1328, %v1309, 0
      %v1390 = vsel %vm1328, %v1310, 0
      %v1393 = vsel %vm1328, %v1311, 0
      %v1396 = vsel %vm1328, %v1312, 0
      %v1399 = vsel %vm1328, %v1313, 0
      %v1402 = vsel %vm1328, %v1314, 0
      %v1405 = vsel %vm1328, %v1315, 0
      %v1408 = vsel %vm1328, %v1316, 0
      %v1411 = vsel %vm1328, %v1317, 0
      %v1414 = vsel %vm1328, %v1318, 0
      %v1417 = vsel %vm1328, %v1319, 0
      %v1420 = vsel %vm1328, %v1320, 0
      %v1423 = vsel %vm1328, %v1321, 0
      %1425 = vmatprep.subr.mxu0 0.0
      %1426 = vmatpush1.msra.mxu0 0.0
      %1427 = vmatprep.subr.mxu0 0.0
      %1428 = vmatpush1.msra.mxu0 0.0
      %1429 = vmatprep.subr.mxu0 0.0
      %1430 = vmatpush1.msra.mxu0 0.0
      %1431 = vmatprep.subr.mxu0 0.0
      %1432 = vmatpush1.msra.mxu0 0.0
      %1433 = vmatprep.subr.mxu0 0.0
      %1434 = vmatpush1.msra.mxu0 0.0
      %1435 = vmatprep.subr.mxu0 0.0
      %1436 = vmatpush1.msra.mxu0 0.0
      %1437 = vmatprep.subr.mxu0 0.0
      %1438 = vmatpush1.msra.mxu0 0.0
      %1439 = vmatprep.subr.mxu0 0.0
      %1440 = vmatpush1.msra.mxu0 0.0
      %1441 = vmatprep.subr.mxu0 0.0
      %1442 = vmatpush1.msra.mxu0 0.0
      %1443 = vmatprep.subr.mxu0 0.0
      %1444 = vmatpush1.msra.mxu0 0.0
      %1445 = vmatprep.subr.mxu0 0.0
      %1446 = vmatpush1.msra.mxu0 0.0
      %1447 = vmatprep.subr.mxu0 0.0
      %1448 = vmatpush1.msra.mxu0 0.0
      %1449 = vmatprep.subr.mxu0 0.0
      %1450 = vmatpush1.msra.mxu0 %v523
      %1451 = vmatprep.subr.mxu0 0.0
      %1452 = vmatpush1.msra.mxu0 %v522
      %1453 = vmatprep.subr.mxu0 0.0
      %1454 = vmatpush1.msra.mxu0 %v521
      %1455 = vmatprep.subr.mxu0 0.0
      %1456 = vmatpush1.msra.mxu0 %v520
      %1457 = vmatprep.subr.mxu0 0.0
      %1458 = vmatpush2.msra.mxu0 0.0
      %1459 = vmatprep.subr.mxu0 0.0
      %1460 = vmatpush2.msra.mxu0 0.0
      %1461 = vmatprep.subr.mxu0 0.0
      %1462 = vmatpush2.msra.mxu0 0.0
      %1463 = vmatprep.subr.mxu0 0.0
      %1464 = vmatpush2.msra.mxu0 0.0
      %1465 = vmatprep.subr.mxu0 0.0
      %1466 = vmatpush2.msra.mxu0 0.0
      %1467 = vmatprep.subr.mxu0 0.0
      %1468 = vmatpush2.msra.mxu0 0.0
      %1469 = vmatprep.subr.mxu0 0.0
      %1470 = vmatpush2.msra.mxu0 0.0
      %1471 = vmatprep.subr.mxu0 0.0
      %1472 = vmatpush2.msra.mxu0 0.0
      %1473 = vmatprep.subr.mxu0 0.0
      %1474 = vmatpush2.msra.mxu0 0.0
      %1475 = vmatprep.subr.mxu0 0.0
      %1476 = vmatpush2.msra.mxu0 0.0
      %1477 = vmatprep.subr.mxu0 0.0
      %1478 = vmatpush2.msra.mxu0 0.0
      %1479 = vmatprep.subr.mxu0 0.0
      %1480 = vmatpush2.msra.mxu0 0.0
      %1481 = vmatprep.subr.mxu0 0.0
      %1482 = vmatpush2.msra.mxu0 0.0
      %1483 = vmatprep.subr.mxu0 0.0
      %1484 = vmatpush2.msra.mxu0 0.0
      %1485 = vmatprep.subr.mxu0 0.0
      %1486 = vmatpush2.msra.mxu0 0.0
      %1487 = vmatprep.subr.mxu0 0.0
      %1488 = vmatpush2.msra.mxu0 0.0
      %1489 = vmatprep.mubr.f32.mxu0 0.0
      %1490 = vmatmul.mubr.f32.gmra.mxu0 %v1330
      %v1491 = vpop.f32.mrf.mxu0
      %v1492 = vadd.f32 %v1326, %v1491
      %v1493 = vpop.f32.mrf.mxu0
      %1494 = vmatprep.mubr.f32.mxu0 0.0
      %1495 = vmatmul.mubr.f32.gmra.mxu0 %v1333
      %v1496 = vpop.f32.mrf.mxu0
      %v1497 = vadd.f32 %v1326, %v1496
      %v1498 = vpop.f32.mrf.mxu0
      %1499 = vmatprep.mubr.f32.mxu0 0.0
      %1500 = vmatmul.mubr.f32.gmra.mxu0 %v1336
      %v1501 = vpop.f32.mrf.mxu0
      %v1502 = vadd.f32 %v1326, %v1501
      %v1503 = vpop.f32.mrf.mxu0
      %1504 = vmatprep.mubr.f32.mxu0 0.0
      %1505 = vmatmul.mubr.f32.gmra.mxu0 %v1339
      %v1506 = vpop.f32.mrf.mxu0
      %v1507 = vadd.f32 %v1326, %v1506
      %v1508 = vpop.f32.mrf.mxu0
      %1509 = vmatprep.mubr.f32.mxu0 0.0
      %1510 = vmatmul.mubr.f32.gmra.mxu0 %v1342
      %v1511 = vpop.f32.mrf.mxu0
      %v1512 = vadd.f32 %v1326, %v1511
      %v1513 = vpop.f32.mrf.mxu0
      %1514 = vmatprep.mubr.f32.mxu0 0.0
      %1515 = vmatmul.mubr.f32.gmra.mxu0 %v1345
      %v1516 = vpop.f32.mrf.mxu0
      %v1517 = vadd.f32 %v1326, %v1516
      %v1518 = vpop.f32.mrf.mxu0
      %1519 = vmatprep.mubr.f32.mxu0 0.0
      %1520 = vmatmul.mubr.f32.gmra.mxu0 %v1348
      %v1521 = vpop.f32.mrf.mxu0
      %v1522 = vadd.f32 %v1326, %v1521
      %v1523 = vpop.f32.mrf.mxu0
      %1524 = vmatprep.mubr.f32.mxu0 0.0
      %1525 = vmatmul.mubr.f32.gmra.mxu0 %v1351
      %v1526 = vpop.f32.mrf.mxu0
      %v1527 = vadd.f32 %v1326, %v1526
      %v1528 = vpop.f32.mrf.mxu0
      %1529 = vmatprep.mubr.f32.mxu0 0.0
      %1530 = vmatmul.mubr.f32.gmra.mxu0 %v1354
      %v1531 = vpop.f32.mrf.mxu0
      %v1532 = vadd.f32 %v1326, %v1531
      %v1533 = vpop.f32.mrf.mxu0
      %1534 = vmatprep.mubr.f32.mxu0 0.0
      %1535 = vmatmul.mubr.f32.gmra.mxu0 %v1357
      %v1536 = vpop.f32.mrf.mxu0
      %v1537 = vadd.f32 %v1326, %v1536
      %v1538 = vpop.f32.mrf.mxu0
      %1539 = vmatprep.mubr.f32.mxu0 0.0
      %1540 = vmatmul.mubr.f32.gmra.mxu0 %v1360
      %v1541 = vpop.f32.mrf.mxu0
      %v1542 = vadd.f32 %v1326, %v1541
      %v1543 = vpop.f32.mrf.mxu0
      %1544 = vmatprep.mubr.f32.mxu0 0.0
      %1545 = vmatmul.mubr.f32.gmra.mxu0 %v1363
      %v1546 = vpop.f32.mrf.mxu0
      %v1547 = vadd.f32 %v1326, %v1546
      %v1548 = vpop.f32.mrf.mxu0
      %1549 = vmatprep.mubr.f32.mxu0 0.0
      %1550 = vmatmul.mubr.f32.gmra.mxu0 %v1366
      %v1551 = vpop.f32.mrf.mxu0
      %v1552 = vadd.f32 %v1326, %v1551
      %v1553 = vpop.f32.mrf.mxu0
      %1554 = vmatprep.mubr.f32.mxu0 0.0
      %1555 = vmatmul.mubr.f32.gmra.mxu0 %v1369
      %v1556 = vpop.f32.mrf.mxu0
      %v1557 = vadd.f32 %v1326, %v1556
      %v1558 = vpop.f32.mrf.mxu0
      %1559 = vmatprep.mubr.f32.mxu0 0.0
      %1560 = vmatmul.mubr.f32.gmra.mxu0 %v1372
      %v1561 = vpop.f32.mrf.mxu0
      %v1562 = vadd.f32 %v1326, %v1561
      %v1563 = vpop.f32.mrf.mxu0
      %1564 = vmatprep.mubr.f32.mxu0 0.0
      %1565 = vmatmul.mubr.f32.gmra.mxu0 %v1375
      %v1566 = vpop.f32.mrf.mxu0
      %v1567 = vadd.f32 %v1326, %v1566
      %v1568 = vpop.f32.mrf.mxu0
      %1569 = vmatprep.mubr.f32.mxu0 0.0
      %1570 = vmatmul.mubr.f32.gmra.mxu0 %v1378
      %v1571 = vpop.f32.mrf.mxu0
      %v1572 = vadd.f32 %v1326, %v1571
      %v1573 = vpop.f32.mrf.mxu0
      %1574 = vmatprep.mubr.f32.mxu0 0.0
      %1575 = vmatmul.mubr.f32.gmra.mxu0 %v1381
      %v1576 = vpop.f32.mrf.mxu0
      %v1577 = vadd.f32 %v1326, %v1576
      %v1578 = vpop.f32.mrf.mxu0
      %1579 = vmatprep.mubr.f32.mxu0 0.0
      %1580 = vmatmul.mubr.f32.gmra.mxu0 %v1384
      %v1581 = vpop.f32.mrf.mxu0
      %v1582 = vadd.f32 %v1326, %v1581
      %v1583 = vpop.f32.mrf.mxu0
      %1584 = vmatprep.mubr.f32.mxu0 0.0
      %1585 = vmatmul.mubr.f32.gmra.mxu0 %v1387
      %v1586 = vpop.f32.mrf.mxu0
      %v1587 = vadd.f32 %v1326, %v1586
      %v1588 = vpop.f32.mrf.mxu0
      %1589 = vmatprep.mubr.f32.mxu0 0.0
      %1590 = vmatmul.mubr.f32.gmra.mxu0 %v1390
      %v1591 = vpop.f32.mrf.mxu0
      %v1592 = vadd.f32 %v1326, %v1591
      %v1593 = vpop.f32.mrf.mxu0
      %1594 = vmatprep.mubr.f32.mxu0 0.0
      %1595 = vmatmul.mubr.f32.gmra.mxu0 %v1393
      %v1596 = vpop.f32.mrf.mxu0
      %v1597 = vadd.f32 %v1326, %v1596
      %v1598 = vpop.f32.mrf.mxu0
      %1599 = vmatprep.mubr.f32.mxu0 0.0
      %1600 = vmatmul.mubr.f32.gmra.mxu0 %v1396
      %v1601 = vpop.f32.mrf.mxu0
      %v1602 = vadd.f32 %v1326, %v1601
      %v1603 = vpop.f32.mrf.mxu0
      %1604 = vmatprep.mubr.f32.mxu0 0.0
      %1605 = vmatmul.mubr.f32.gmra.mxu0 %v1399
      %v1606 = vpop.f32.mrf.mxu0
      %v1607 = vadd.f32 %v1326, %v1606
      %v1608 = vpop.f32.mrf.mxu0
      %1609 = vmatprep.mubr.f32.mxu0 0.0
      %1610 = vmatmul.mubr.f32.gmra.mxu0 %v1402
      %v1611 = vpop.f32.mrf.mxu0
      %v1612 = vadd.f32 %v1326, %v1611
      %v1613 = vpop.f32.mrf.mxu0
      %1614 = vmatprep.mubr.f32.mxu0 0.0
      %1615 = vmatmul.mubr.f32.gmra.mxu0 %v1405
      %v1616 = vpop.f32.mrf.mxu0
      %v1617 = vadd.f32 %v1326, %v1616
      %v1618 = vpop.f32.mrf.mxu0
      %1619 = vmatprep.mubr.f32.mxu0 0.0
      %1620 = vmatmul.mubr.f32.gmra.mxu0 %v1408
      %v1621 = vpop.f32.mrf.mxu0
      %v1622 = vadd.f32 %v1326, %v1621
      %v1623 = vpop.f32.mrf.mxu0
      %1624 = vmatprep.mubr.f32.mxu0 0.0
      %1625 = vmatmul.mubr.f32.gmra.mxu0 %v1411
      %v1626 = vpop.f32.mrf.mxu0
      %v1627 = vadd.f32 %v1326, %v1626
      %v1628 = vpop.f32.mrf.mxu0
      %1629 = vmatprep.mubr.f32.mxu0 0.0
      %1630 = vmatmul.mubr.f32.gmra.mxu0 %v1414
      %v1631 = vpop.f32.mrf.mxu0
      %v1632 = vadd.f32 %v1326, %v1631
      %v1633 = vpop.f32.mrf.mxu0
      %1634 = vmatprep.mubr.f32.mxu0 0.0
      %1635 = vmatmul.mubr.f32.gmra.mxu0 %v1417
      %v1636 = vpop.f32.mrf.mxu0
      %v1637 = vadd.f32 %v1326, %v1636
      %v1638 = vpop.f32.mrf.mxu0
      %1639 = vmatprep.mubr.f32.mxu0 0.0
      %1640 = vmatmul.mubr.f32.gmra.mxu0 %v1420
      %v1641 = vpop.f32.mrf.mxu0
      %v1642 = vadd.f32 %v1326, %v1641
      %v1643 = vpop.f32.mrf.mxu0
      %1644 = vmatprep.mubr.f32.mxu0 0.0
      %1645 = vmatmul.mubr.f32.gmra.mxu0 %v1423
      %v1646 = vpop.f32.mrf.mxu0
      %v1647 = vadd.f32 %v1326, %v1646
      %v1648 = vpop.f32.mrf.mxu0
      %1649 = vdwg.mxu0
      %v1650 = vtanh.pop %v1492
      %v1651 = vtanh.pop %v1497
      %v1652 = vtanh.pop %v1502
      %v1653 = vtanh.pop %v1507
      %v1654 = vtanh.pop %v1512
      %v1655 = vtanh.pop %v1517
      %v1656 = vtanh.pop %v1522
      %v1657 = vtanh.pop %v1527
      %v1658 = vtanh.pop %v1532
      %v1659 = vtanh.pop %v1537
      %v1660 = vtanh.pop %v1542
      %v1661 = vtanh.pop %v1547
      %v1662 = vtanh.pop %v1552
      %v1663 = vtanh.pop %v1557
      %v1664 = vtanh.pop %v1562
      %v1665 = vtanh.pop %v1567
      %v1666 = vtanh.pop %v1572
      %v1667 = vtanh.pop %v1577
      %v1668 = vtanh.pop %v1582
      %v1669 = vtanh.pop %v1587
      %v1670 = vtanh.pop %v1592
      %v1671 = vtanh.pop %v1597
      %v1672 = vtanh.pop %v1602
      %v1673 = vtanh.pop %v1607
      %v1674 = vtanh.pop %v1612
      %v1675 = vtanh.pop %v1617
      %v1676 = vtanh.pop %v1622
      %v1677 = vtanh.pop %v1627
      %v1678 = vtanh.pop %v1632
      %v1679 = vtanh.pop %v1637
      %v1680 = vtanh.pop %v1642
      %v1681 = vtanh.pop %v1647
      %v1683 = vlaneseq
      %v1684 = vshrl.u32 %v1683, 7
      %v1685 = vsub.s32 0, %v1684
      %v1686 = vrot.slane %v525, %v1685
      %v1688 = vmul.f32 %v1650, %v1686
      %v1689 = vmul.f32 %v1651, %v1686
      %v1690 = vmul.f32 %v1652, %v1686
      %v1691 = vmul.f32 %v1653, %v1686
      %v1692 = vmul.f32 %v1654, %v1686
      %v1693 = vmul.f32 %v1655, %v1686
      %v1694 = vmul.f32 %v1656, %v1686
      %v1695 = vmul.f32 %v1657, %v1686
      %v1696 = vmul.f32 %v1658, %v1686
      %v1697 = vmul.f32 %v1659, %v1686
      %v1698 = vmul.f32 %v1660, %v1686
      %v1699 = vmul.f32 %v1661, %v1686
      %v1700 = vmul.f32 %v1662, %v1686
      %v1701 = vmul.f32 %v1663, %v1686
      %v1702 = vmul.f32 %v1664, %v1686
      %v1703 = vmul.f32 %v1665, %v1686
      %v1704 = vmul.f32 %v1666, %v1686
      %v1705 = vmul.f32 %v1667, %v1686
      %v1706 = vmul.f32 %v1668, %v1686
      %v1707 = vmul.f32 %v1669, %v1686
      %v1708 = vmul.f32 %v1670, %v1686
      %v1709 = vmul.f32 %v1671, %v1686
      %v1710 = vmul.f32 %v1672, %v1686
      %v1711 = vmul.f32 %v1673, %v1686
      %v1712 = vmul.f32 %v1674, %v1686
      %v1713 = vmul.f32 %v1675, %v1686
      %v1714 = vmul.f32 %v1676, %v1686
      %v1715 = vmul.f32 %v1677, %v1686
      %v1716 = vmul.f32 %v1678, %v1686
      %v1717 = vmul.f32 %v1679, %v1686
      %v1718 = vmul.f32 %v1680, %v1686
      %v1719 = vmul.f32 %v1681, %v1686
      %v1720 = vsel %vm1328, %v1688, 0.0
      %1721 = vadd.xlane.f32.xlu0 %v1720
      %v1722 = vpop.xlane.xlu0 %1721
      %v1723 = vsel %vm1328, %v1689, 0.0
      %1724 = vadd.xlane.f32.xlu0 %v1723
      %v1725 = vpop.xlane.xlu0 %1724
      %v1726 = vsel %vm1328, %v1690, 0.0
      %1727 = vadd.xlane.f32.xlu0 %v1726
      %v1728 = vpop.xlane.xlu0 %1727
      %v1729 = vsel %vm1328, %v1691, 0.0
      %1730 = vadd.xlane.f32.xlu0 %v1729
      %v1731 = vpop.xlane.xlu0 %1730
      %v1732 = vsel %vm1328, %v1692, 0.0
      %1733 = vadd.xlane.f32.xlu0 %v1732
      %v1734 = vpop.xlane.xlu0 %1733
      %v1735 = vsel %vm1328, %v1693, 0.0
      %1736 = vadd.xlane.f32.xlu0 %v1735
      %v1737 = vpop.xlane.xlu0 %1736
      %v1738 = vsel %vm1328, %v1694, 0.0
      %1739 = vadd.xlane.f32.xlu0 %v1738
      %v1740 = vpop.xlane.xlu0 %1739
      %v1741 = vsel %vm1328, %v1695, 0.0
      %1742 = vadd.xlane.f32.xlu0 %v1741
      %v1743 = vpop.xlane.xlu0 %1742
      %v1744 = vsel %vm1328, %v1696, 0.0
      %1745 = vadd.xlane.f32.xlu0 %v1744
      %v1746 = vpop.xlane.xlu0 %1745
      %v1747 = vsel %vm1328, %v1697, 0.0
      %1748 = vadd.xlane.f32.xlu0 %v1747
      %v1749 = vpop.xlane.xlu0 %1748
      %v1750 = vsel %vm1328, %v1698, 0.0
      %1751 = vadd.xlane.f32.xlu0 %v1750
      %v1752 = vpop.xlane.xlu0 %1751
      %v1753 = vsel %vm1328, %v1699, 0.0
      %1754 = vadd.xlane.f32.xlu0 %v1753
      %v1755 = vpop.xlane.xlu0 %1754
      %v1756 = vsel %vm1328, %v1700, 0.0
      %1757 = vadd.xlane.f32.xlu0 %v1756
      %v1758 = vpop.xlane.xlu0 %1757
      %v1759 = vsel %vm1328, %v1701, 0.0
      %1760 = vadd.xlane.f32.xlu0 %v1759
      %v1761 = vpop.xlane.xlu0 %1760
      %v1762 = vsel %vm1328, %v1702, 0.0
      %1763 = vadd.xlane.f32.xlu0 %v1762
      %v1764 = vpop.xlane.xlu0 %1763
      %v1765 = vsel %vm1328, %v1703, 0.0
      %1766 = vadd.xlane.f32.xlu0 %v1765
      %v1767 = vpop.xlane.xlu0 %1766
      %v1768 = vsel %vm1328, %v1704, 0.0
      %1769 = vadd.xlane.f32.xlu0 %v1768
      %v1770 = vpop.xlane.xlu0 %1769
      %v1771 = vsel %vm1328, %v1705, 0.0
      %1772 = vadd.xlane.f32.xlu0 %v1771
      %v1773 = vpop.xlane.xlu0 %1772
      %v1774 = vsel %vm1328, %v1706, 0.0
      %1775 = vadd.xlane.f32.xlu0 %v1774
      %v1776 = vpop.xlane.xlu0 %1775
      %v1777 = vsel %vm1328, %v1707, 0.0
      %1778 = vadd.xlane.f32.xlu0 %v1777
      %v1779 = vpop.xlane.xlu0 %1778
      %v1780 = vsel %vm1328, %v1708, 0.0
      %1781 = vadd.xlane.f32.xlu0 %v1780
      %v1782 = vpop.xlane.xlu0 %1781
      %v1783 = vsel %vm1328, %v1709, 0.0
      %1784 = vadd.xlane.f32.xlu0 %v1783
      %v1785 = vpop.xlane.xlu0 %1784
      %v1786 = vsel %vm1328, %v1710, 0.0
      %1787 = vadd.xlane.f32.xlu0 %v1786
      %v1788 = vpop.xlane.xlu0 %1787
      %v1789 = vsel %vm1328, %v1711, 0.0
      %1790 = vadd.xlane.f32.xlu0 %v1789
      %v1791 = vpop.xlane.xlu0 %1790
      %v1792 = vsel %vm1328, %v1712, 0.0
      %1793 = vadd.xlane.f32.xlu0 %v1792
      %v1794 = vpop.xlane.xlu0 %1793
      %v1795 = vsel %vm1328, %v1713, 0.0
      %1796 = vadd.xlane.f32.xlu0 %v1795
      %v1797 = vpop.xlane.xlu0 %1796
      %v1798 = vsel %vm1328, %v1714, 0.0
      %1799 = vadd.xlane.f32.xlu0 %v1798
      %v1800 = vpop.xlane.xlu0 %1799
      %v1801 = vsel %vm1328, %v1715, 0.0
      %1802 = vadd.xlane.f32.xlu0 %v1801
      %v1803 = vpop.xlane.xlu0 %1802
      %v1804 = vsel %vm1328, %v1716, 0.0
      %1805 = vadd.xlane.f32.xlu0 %v1804
      %v1806 = vpop.xlane.xlu0 %1805
      %v1807 = vsel %vm1328, %v1717, 0.0
      %1808 = vadd.xlane.f32.xlu0 %v1807
      %v1809 = vpop.xlane.xlu0 %1808
      %v1810 = vsel %vm1328, %v1718, 0.0
      %1811 = vadd.xlane.f32.xlu0 %v1810
      %v1812 = vpop.xlane.xlu0 %1811
      %v1813 = vsel %vm1328, %v1719, 0.0
      %1814 = vadd.xlane.f32.xlu0 %v1813
      %v1815 = vpop.xlane.xlu0 %1814
      %v1817 = vlaneseq
      %v1818 = vshrl.u32 %v1817, 7
      %v1819 = vsub.s32 0, %v1818
      %v1820 = vrot.slane %v526, %v1819
      %v1822 = vadd.f32 %v1722, %v1820
      %v1823 = vadd.f32 %v1725, %v1820
      %v1824 = vadd.f32 %v1728, %v1820
      %v1825 = vadd.f32 %v1731, %v1820
      %v1826 = vadd.f32 %v1734, %v1820
      %v1827 = vadd.f32 %v1737, %v1820
      %v1828 = vadd.f32 %v1740, %v1820
      %v1829 = vadd.f32 %v1743, %v1820
      %v1830 = vadd.f32 %v1746, %v1820
      %v1831 = vadd.f32 %v1749, %v1820
      %v1832 = vadd.f32 %v1752, %v1820
      %v1833 = vadd.f32 %v1755, %v1820
      %v1834 = vadd.f32 %v1758, %v1820
      %v1835 = vadd.f32 %v1761, %v1820
      %v1836 = vadd.f32 %v1764, %v1820
      %v1837 = vadd.f32 %v1767, %v1820
      %v1838 = vadd.f32 %v1770, %v1820
      %v1839 = vadd.f32 %v1773, %v1820
      %v1840 = vadd.f32 %v1776, %v1820
      %v1841 = vadd.f32 %v1779, %v1820
      %v1842 = vadd.f32 %v1782, %v1820
      %v1843 = vadd.f32 %v1785, %v1820
      %v1844 = vadd.f32 %v1788, %v1820
      %v1845 = vadd.f32 %v1791, %v1820
      %v1846 = vadd.f32 %v1794, %v1820
      %v1847 = vadd.f32 %v1797, %v1820
      %v1848 = vadd.f32 %v1800, %v1820
      %v1849 = vadd.f32 %v1803, %v1820
      %v1850 = vadd.f32 %v1806, %v1820
      %v1851 = vadd.f32 %v1809, %v1820
      %v1852 = vadd.f32 %v1812, %v1820
      %v1853 = vadd.f32 %v1815, %v1820
      %v1854 = vmul.f32 %v1822, 0.99
      %v1855 = vmul.f32 %v1823, 0.99
      %v1856 = vmul.f32 %v1824, 0.99
      %v1857 = vmul.f32 %v1825, 0.99
      %v1858 = vmul.f32 %v1826, 0.99
      %v1859 = vmul.f32 %v1827, 0.99
      %v1860 = vmul.f32 %v1828, 0.99
      %v1861 = vmul.f32 %v1829, 0.99
      %v1862 = vmul.f32 %v1830, 0.99
      %v1863 = vmul.f32 %v1831, 0.99
      %v1864 = vmul.f32 %v1832, 0.99
      %v1865 = vmul.f32 %v1833, 0.99
      %v1866 = vmul.f32 %v1834, 0.99
      %v1867 = vmul.f32 %v1835, 0.99
      %v1868 = vmul.f32 %v1836, 0.99
      %v1869 = vmul.f32 %v1837, 0.99
      %v1870 = vmul.f32 %v1838, 0.99
      %v1871 = vmul.f32 %v1839, 0.99
      %v1872 = vmul.f32 %v1840, 0.99
      %v1873 = vmul.f32 %v1841, 0.99
      %v1874 = vmul.f32 %v1842, 0.99
      %v1875 = vmul.f32 %v1843, 0.99
      %v1876 = vmul.f32 %v1844, 0.99
      %v1877 = vmul.f32 %v1845, 0.99
      %v1878 = vmul.f32 %v1846, 0.99
      %v1879 = vmul.f32 %v1847, 0.99
      %v1880 = vmul.f32 %v1848, 0.99
      %v1881 = vmul.f32 %v1849, 0.99
      %v1882 = vmul.f32 %v1850, 0.99
      %v1883 = vmul.f32 %v1851, 0.99
      %v1884 = vmul.f32 %v1852, 0.99
      %v1885 = vmul.f32 %v1853, 0.99
      %v1886 = vadd.f32 %v931, %v1854
      %v1887 = vadd.f32 %v932, %v1855
      %v1888 = vadd.f32 %v933, %v1856
      %v1889 = vadd.f32 %v934, %v1857
      %v1890 = vadd.f32 %v935, %v1858
      %v1891 = vadd.f32 %v936, %v1859
      %v1892 = vadd.f32 %v937, %v1860
      %v1893 = vadd.f32 %v938, %v1861
      %v1894 = vadd.f32 %v939, %v1862
      %v1895 = vadd.f32 %v940, %v1863
      %v1896 = vadd.f32 %v941, %v1864
      %v1897 = vadd.f32 %v942, %v1865
      %v1898 = vadd.f32 %v943, %v1866
      %v1899 = vadd.f32 %v944, %v1867
      %v1900 = vadd.f32 %v945, %v1868
      %v1901 = vadd.f32 %v946, %v1869
      %v1902 = vadd.f32 %v947, %v1870
      %v1903 = vadd.f32 %v948, %v1871
      %v1904 = vadd.f32 %v949, %v1872
      %v1905 = vadd.f32 %v950, %v1873
      %v1906 = vadd.f32 %v951, %v1874
      %v1907 = vadd.f32 %v952, %v1875
      %v1908 = vadd.f32 %v953, %v1876
      %v1909 = vadd.f32 %v954, %v1877
      %v1910 = vadd.f32 %v955, %v1878
      %v1911 = vadd.f32 %v956, %v1879
      %v1912 = vadd.f32 %v957, %v1880
      %v1913 = vadd.f32 %v958, %v1881
      %v1914 = vadd.f32 %v959, %v1882
      %v1915 = vadd.f32 %v960, %v1883
      %v1916 = vadd.f32 %v961, %v1884
      %v1917 = vadd.f32 %v962, %v1885
      %v1919 = vsel %vm629, %v527, 0
      %v1922 = vsel %vm629, %v528, 0
      %v1925 = vsel %vm629, %v529, 0
      %v1928 = vsel %vm629, %v530, 0
      %v1931 = vsel %vm629, %v531, 0
      %v1934 = vsel %vm629, %v532, 0
      %v1937 = vsel %vm629, %v533, 0
      %v1940 = vsel %vm629, %v534, 0
      %v1943 = vsel %vm629, %v535, 0
      %v1946 = vsel %vm629, %v536, 0
      %v1949 = vsel %vm629, %v537, 0
      %v1952 = vsel %vm629, %v538, 0
      %v1955 = vsel %vm629, %v539, 0
      %v1958 = vsel %vm629, %v540, 0
      %v1961 = vsel %vm629, %v541, 0
      %v1964 = vsel %vm629, %v542, 0
      %v1967 = vsel %vm629, %v543, 0
      %v1970 = vsel %vm629, %v544, 0
      %v1973 = vsel %vm629, %v545, 0
      %v1976 = vsel %vm629, %v546, 0
      %v1979 = vsel %vm629, %v547, 0
      %v1982 = vsel %vm629, %v548, 0
      %v1985 = vsel %vm629, %v549, 0
      %v1988 = vsel %vm629, %v550, 0
      %v1991 = vsel %vm629, %v551, 0
      %v1994 = vsel %vm629, %v552, 0
      %v1997 = vsel %vm629, %v553, 0
      %v2000 = vsel %vm629, %v554, 0
      %v2003 = vsel %vm629, %v555, 0
      %v2006 = vsel %vm629, %v556, 0
      %v2009 = vsel %vm629, %v557, 0
      %v2012 = vsel %vm629, %v558, 0
      %2014 = vmatprep.subr.mxu0 0.0
      %2015 = vmatpush1.msra.mxu0 0.0
      %2016 = vmatprep.subr.mxu0 0.0
      %2017 = vmatpush1.msra.mxu0 0.0
      %2018 = vmatprep.subr.mxu0 0.0
      %2019 = vmatpush1.msra.mxu0 0.0
      %2020 = vmatprep.subr.mxu0 0.0
      %2021 = vmatpush1.msra.mxu0 0.0
      %2022 = vmatprep.subr.mxu0 0.0
      %2023 = vmatpush1.msra.mxu0 0.0
      %2024 = vmatprep.subr.mxu0 0.0
      %2025 = vmatpush1.msra.mxu0 0.0
      %2026 = vmatprep.subr.mxu0 0.0
      %2027 = vmatpush1.msra.mxu0 0.0
      %2028 = vmatprep.subr.mxu0 0.0
      %2029 = vmatpush1.msra.mxu0 0.0
      %2030 = vmatprep.subr.mxu0 0.0
      %2031 = vmatpush1.msra.mxu0 0.0
      %2032 = vmatprep.subr.mxu0 0.0
      %2033 = vmatpush1.msra.mxu0 0.0
      %2034 = vmatprep.subr.mxu0 0.0
      %2035 = vmatpush1.msra.mxu0 0.0
      %2036 = vmatprep.subr.mxu0 0.0
      %2037 = vmatpush1.msra.mxu0 0.0
      %2038 = vmatprep.subr.mxu0 0.0
      %2039 = vmatpush1.msra.mxu0 0.0
      %2040 = vmatprep.subr.mxu0 0.0
      %2041 = vmatpush1.msra.mxu0 0.0
      %2042 = vmatprep.subr.mxu0 0.0
      %2043 = vmatpush1.msra.mxu0 %v518
      %2044 = vmatprep.subr.mxu0 0.0
      %2045 = vmatpush1.msra.mxu0 %v517
      %2046 = vmatprep.subr.mxu0 0.0
      %2047 = vmatpush2.msra.mxu0 0.0
      %2048 = vmatprep.subr.mxu0 0.0
      %2049 = vmatpush2.msra.mxu0 0.0
      %2050 = vmatprep.subr.mxu0 0.0
      %2051 = vmatpush2.msra.mxu0 0.0
      %2052 = vmatprep.subr.mxu0 0.0
      %2053 = vmatpush2.msra.mxu0 0.0
      %2054 = vmatprep.subr.mxu0 0.0
      %2055 = vmatpush2.msra.mxu0 0.0
      %2056 = vmatprep.subr.mxu0 0.0
      %2057 = vmatpush2.msra.mxu0 0.0
      %2058 = vmatprep.subr.mxu0 0.0
      %2059 = vmatpush2.msra.mxu0 0.0
      %2060 = vmatprep.subr.mxu0 0.0
      %2061 = vmatpush2.msra.mxu0 0.0
      %2062 = vmatprep.subr.mxu0 0.0
      %2063 = vmatpush2.msra.mxu0 0.0
      %2064 = vmatprep.subr.mxu0 0.0
      %2065 = vmatpush2.msra.mxu0 0.0
      %2066 = vmatprep.subr.mxu0 0.0
      %2067 = vmatpush2.msra.mxu0 0.0
      %2068 = vmatprep.subr.mxu0 0.0
      %2069 = vmatpush2.msra.mxu0 0.0
      %2070 = vmatprep.subr.mxu0 0.0
      %2071 = vmatpush2.msra.mxu0 0.0
      %2072 = vmatprep.subr.mxu0 0.0
      %2073 = vmatpush2.msra.mxu0 0.0
      %2074 = vmatprep.subr.mxu0 0.0
      %2075 = vmatpush2.msra.mxu0 0.0
      %2076 = vmatprep.subr.mxu0 0.0
      %2077 = vmatpush2.msra.mxu0 0.0
      %2078 = vmatprep.mubr.f32.mxu0 0.0
      %2079 = vmatmul.mubr.f32.gmra.mxu0 %v1919
      %v2080 = vpop.f32.mrf.mxu0
      %v2081 = vadd.f32 %v967, %v2080
      %v2082 = vpop.f32.mrf.mxu0
      %2083 = vmatprep.mubr.f32.mxu0 0.0
      %2084 = vmatmul.mubr.f32.gmra.mxu0 %v1922
      %v2085 = vpop.f32.mrf.mxu0
      %v2086 = vadd.f32 %v967, %v2085
      %v2087 = vpop.f32.mrf.mxu0
      %2088 = vmatprep.mubr.f32.mxu0 0.0
      %2089 = vmatmul.mubr.f32.gmra.mxu0 %v1925
      %v2090 = vpop.f32.mrf.mxu0
      %v2091 = vadd.f32 %v967, %v2090
      %v2092 = vpop.f32.mrf.mxu0
      %2093 = vmatprep.mubr.f32.mxu0 0.0
      %2094 = vmatmul.mubr.f32.gmra.mxu0 %v1928
      %v2095 = vpop.f32.mrf.mxu0
      %v2096 = vadd.f32 %v967, %v2095
      %v2097 = vpop.f32.mrf.mxu0
      %2098 = vmatprep.mubr.f32.mxu0 0.0
      %2099 = vmatmul.mubr.f32.gmra.mxu0 %v1931
      %v2100 = vpop.f32.mrf.mxu0
      %v2101 = vadd.f32 %v967, %v2100
      %v2102 = vpop.f32.mrf.mxu0
      %2103 = vmatprep.mubr.f32.mxu0 0.0
      %2104 = vmatmul.mubr.f32.gmra.mxu0 %v1934
      %v2105 = vpop.f32.mrf.mxu0
      %v2106 = vadd.f32 %v967, %v2105
      %v2107 = vpop.f32.mrf.mxu0
      %2108 = vmatprep.mubr.f32.mxu0 0.0
      %2109 = vmatmul.mubr.f32.gmra.mxu0 %v1937
      %v2110 = vpop.f32.mrf.mxu0
      %v2111 = vadd.f32 %v967, %v2110
      %v2112 = vpop.f32.mrf.mxu0
      %2113 = vmatprep.mubr.f32.mxu0 0.0
      %2114 = vmatmul.mubr.f32.gmra.mxu0 %v1940
      %v2115 = vpop.f32.mrf.mxu0
      %v2116 = vadd.f32 %v967, %v2115
      %v2117 = vpop.f32.mrf.mxu0
      %2118 = vmatprep.mubr.f32.mxu0 0.0
      %2119 = vmatmul.mubr.f32.gmra.mxu0 %v1943
      %v2120 = vpop.f32.mrf.mxu0
      %v2121 = vadd.f32 %v967, %v2120
      %v2122 = vpop.f32.mrf.mxu0
      %2123 = vmatprep.mubr.f32.mxu0 0.0
      %2124 = vmatmul.mubr.f32.gmra.mxu0 %v1946
      %v2125 = vpop.f32.mrf.mxu0
      %v2126 = vadd.f32 %v967, %v2125
      %v2127 = vpop.f32.mrf.mxu0
      %2128 = vmatprep.mubr.f32.mxu0 0.0
      %2129 = vmatmul.mubr.f32.gmra.mxu0 %v1949
      %v2130 = vpop.f32.mrf.mxu0
      %v2131 = vadd.f32 %v967, %v2130
      %v2132 = vpop.f32.mrf.mxu0
      %2133 = vmatprep.mubr.f32.mxu0 0.0
      %2134 = vmatmul.mubr.f32.gmra.mxu0 %v1952
      %v2135 = vpop.f32.mrf.mxu0
      %v2136 = vadd.f32 %v967, %v2135
      %v2137 = vpop.f32.mrf.mxu0
      %2138 = vmatprep.mubr.f32.mxu0 0.0
      %2139 = vmatmul.mubr.f32.gmra.mxu0 %v1955
      %v2140 = vpop.f32.mrf.mxu0
      %v2141 = vadd.f32 %v967, %v2140
      %v2142 = vpop.f32.mrf.mxu0
      %2143 = vmatprep.mubr.f32.mxu0 0.0
      %2144 = vmatmul.mubr.f32.gmra.mxu0 %v1958
      %v2145 = vpop.f32.mrf.mxu0
      %v2146 = vadd.f32 %v967, %v2145
      %v2147 = vpop.f32.mrf.mxu0
      %2148 = vmatprep.mubr.f32.mxu0 0.0
      %2149 = vmatmul.mubr.f32.gmra.mxu0 %v1961
      %v2150 = vpop.f32.mrf.mxu0
      %v2151 = vadd.f32 %v967, %v2150
      %v2152 = vpop.f32.mrf.mxu0
      %2153 = vmatprep.mubr.f32.mxu0 0.0
      %2154 = vmatmul.mubr.f32.gmra.mxu0 %v1964
      %v2155 = vpop.f32.mrf.mxu0
      %v2156 = vadd.f32 %v967, %v2155
      %v2157 = vpop.f32.mrf.mxu0
      %2158 = vmatprep.mubr.f32.mxu0 0.0
      %2159 = vmatmul.mubr.f32.gmra.mxu0 %v1967
      %v2160 = vpop.f32.mrf.mxu0
      %v2161 = vadd.f32 %v967, %v2160
      %v2162 = vpop.f32.mrf.mxu0
      %2163 = vmatprep.mubr.f32.mxu0 0.0
      %2164 = vmatmul.mubr.f32.gmra.mxu0 %v1970
      %v2165 = vpop.f32.mrf.mxu0
      %v2166 = vadd.f32 %v967, %v2165
      %v2167 = vpop.f32.mrf.mxu0
      %2168 = vmatprep.mubr.f32.mxu0 0.0
      %2169 = vmatmul.mubr.f32.gmra.mxu0 %v1973
      %v2170 = vpop.f32.mrf.mxu0
      %v2171 = vadd.f32 %v967, %v2170
      %v2172 = vpop.f32.mrf.mxu0
      %2173 = vmatprep.mubr.f32.mxu0 0.0
      %2174 = vmatmul.mubr.f32.gmra.mxu0 %v1976
      %v2175 = vpop.f32.mrf.mxu0
      %v2176 = vadd.f32 %v967, %v2175
      %v2177 = vpop.f32.mrf.mxu0
      %2178 = vmatprep.mubr.f32.mxu0 0.0
      %2179 = vmatmul.mubr.f32.gmra.mxu0 %v1979
      %v2180 = vpop.f32.mrf.mxu0
      %v2181 = vadd.f32 %v967, %v2180
      %v2182 = vpop.f32.mrf.mxu0
      %2183 = vmatprep.mubr.f32.mxu0 0.0
      %2184 = vmatmul.mubr.f32.gmra.mxu0 %v1982
      %v2185 = vpop.f32.mrf.mxu0
      %v2186 = vadd.f32 %v967, %v2185
      %v2187 = vpop.f32.mrf.mxu0
      %2188 = vmatprep.mubr.f32.mxu0 0.0
      %2189 = vmatmul.mubr.f32.gmra.mxu0 %v1985
      %v2190 = vpop.f32.mrf.mxu0
      %v2191 = vadd.f32 %v967, %v2190
      %v2192 = vpop.f32.mrf.mxu0
      %2193 = vmatprep.mubr.f32.mxu0 0.0
      %2194 = vmatmul.mubr.f32.gmra.mxu0 %v1988
      %v2195 = vpop.f32.mrf.mxu0
      %v2196 = vadd.f32 %v967, %v2195
      %v2197 = vpop.f32.mrf.mxu0
      %2198 = vmatprep.mubr.f32.mxu0 0.0
      %2199 = vmatmul.mubr.f32.gmra.mxu0 %v1991
      %v2200 = vpop.f32.mrf.mxu0
      %v2201 = vadd.f32 %v967, %v2200
      %v2202 = vpop.f32.mrf.mxu0
      %2203 = vmatprep.mubr.f32.mxu0 0.0
      %2204 = vmatmul.mubr.f32.gmra.mxu0 %v1994
      %v2205 = vpop.f32.mrf.mxu0
      %v2206 = vadd.f32 %v967, %v2205
      %v2207 = vpop.f32.mrf.mxu0
      %2208 = vmatprep.mubr.f32.mxu0 0.0
      %2209 = vmatmul.mubr.f32.gmra.mxu0 %v1997
      %v2210 = vpop.f32.mrf.mxu0
      %v2211 = vadd.f32 %v967, %v2210
      %v2212 = vpop.f32.mrf.mxu0
      %2213 = vmatprep.mubr.f32.mxu0 0.0
      %2214 = vmatmul.mubr.f32.gmra.mxu0 %v2000
      %v2215 = vpop.f32.mrf.mxu0
      %v2216 = vadd.f32 %v967, %v2215
      %v2217 = vpop.f32.mrf.mxu0
      %2218 = vmatprep.mubr.f32.mxu0 0.0
      %2219 = vmatmul.mubr.f32.gmra.mxu0 %v2003
      %v2220 = vpop.f32.mrf.mxu0
      %v2221 = vadd.f32 %v967, %v2220
      %v2222 = vpop.f32.mrf.mxu0
      %2223 = vmatprep.mubr.f32.mxu0 0.0
      %2224 = vmatmul.mubr.f32.gmra.mxu0 %v2006
      %v2225 = vpop.f32.mrf.mxu0
      %v2226 = vadd.f32 %v967, %v2225
      %v2227 = vpop.f32.mrf.mxu0
      %2228 = vmatprep.mubr.f32.mxu0 0.0
      %2229 = vmatmul.mubr.f32.gmra.mxu0 %v2009
      %v2230 = vpop.f32.mrf.mxu0
      %v2231 = vadd.f32 %v967, %v2230
      %v2232 = vpop.f32.mrf.mxu0
      %2233 = vmatprep.mubr.f32.mxu0 0.0
      %2234 = vmatmul.mubr.f32.gmra.mxu0 %v2012
      %v2235 = vpop.f32.mrf.mxu0
      %v2236 = vadd.f32 %v967, %v2235
      %v2237 = vpop.f32.mrf.mxu0
      %2238 = vdwg.mxu0
      %v2239 = vtanh.pop %v2081
      %v2240 = vtanh.pop %v2086
      %v2241 = vtanh.pop %v2091
      %v2242 = vtanh.pop %v2096
      %v2243 = vtanh.pop %v2101
      %v2244 = vtanh.pop %v2106
      %v2245 = vtanh.pop %v2111
      %v2246 = vtanh.pop %v2116
      %v2247 = vtanh.pop %v2121
      %v2248 = vtanh.pop %v2126
      %v2249 = vtanh.pop %v2131
      %v2250 = vtanh.pop %v2136
      %v2251 = vtanh.pop %v2141
      %v2252 = vtanh.pop %v2146
      %v2253 = vtanh.pop %v2151
      %v2254 = vtanh.pop %v2156
      %v2255 = vtanh.pop %v2161
      %v2256 = vtanh.pop %v2166
      %v2257 = vtanh.pop %v2171
      %v2258 = vtanh.pop %v2176
      %v2259 = vtanh.pop %v2181
      %v2260 = vtanh.pop %v2186
      %v2261 = vtanh.pop %v2191
      %v2262 = vtanh.pop %v2196
      %v2263 = vtanh.pop %v2201
      %v2264 = vtanh.pop %v2206
      %v2265 = vtanh.pop %v2211
      %v2266 = vtanh.pop %v2216
      %v2267 = vtanh.pop %v2221
      %v2268 = vtanh.pop %v2226
      %v2269 = vtanh.pop %v2231
      %v2270 = vtanh.pop %v2236
      %v2272 = vsel %vm1328, %v2239, 0
      %v2275 = vsel %vm1328, %v2240, 0
      %v2278 = vsel %vm1328, %v2241, 0
      %v2281 = vsel %vm1328, %v2242, 0
      %v2284 = vsel %vm1328, %v2243, 0
      %v2287 = vsel %vm1328, %v2244, 0
      %v2290 = vsel %vm1328, %v2245, 0
      %v2293 = vsel %vm1328, %v2246, 0
      %v2296 = vsel %vm1328, %v2247, 0
      %v2299 = vsel %vm1328, %v2248, 0
      %v2302 = vsel %vm1328, %v2249, 0
      %v2305 = vsel %vm1328, %v2250, 0
      %v2308 = vsel %vm1328, %v2251, 0
      %v2311 = vsel %vm1328, %v2252, 0
      %v2314 = vsel %vm1328, %v2253, 0
      %v2317 = vsel %vm1328, %v2254, 0
      %v2320 = vsel %vm1328, %v2255, 0
      %v2323 = vsel %vm1328, %v2256, 0
      %v2326 = vsel %vm1328, %v2257, 0
      %v2329 = vsel %vm1328, %v2258, 0
      %v2332 = vsel %vm1328, %v2259, 0
      %v2335 = vsel %vm1328, %v2260, 0
      %v2338 = vsel %vm1328, %v2261, 0
      %v2341 = vsel %vm1328, %v2262, 0
      %v2344 = vsel %vm1328, %v2263, 0
      %v2347 = vsel %vm1328, %v2264, 0
      %v2350 = vsel %vm1328, %v2265, 0
      %v2353 = vsel %vm1328, %v2266, 0
      %v2356 = vsel %vm1328, %v2267, 0
      %v2359 = vsel %vm1328, %v2268, 0
      %v2362 = vsel %vm1328, %v2269, 0
      %v2365 = vsel %vm1328, %v2270, 0
      %2367 = vmatprep.subr.mxu0 0.0
      %2368 = vmatpush1.msra.mxu0 0.0
      %2369 = vmatprep.subr.mxu0 0.0
      %2370 = vmatpush1.msra.mxu0 0.0
      %2371 = vmatprep.subr.mxu0 0.0
      %2372 = vmatpush1.msra.mxu0 0.0
      %2373 = vmatprep.subr.mxu0 0.0
      %2374 = vmatpush1.msra.mxu0 0.0
      %2375 = vmatprep.subr.mxu0 0.0
      %2376 = vmatpush1.msra.mxu0 0.0
      %2377 = vmatprep.subr.mxu0 0.0
      %2378 = vmatpush1.msra.mxu0 0.0
      %2379 = vmatprep.subr.mxu0 0.0
      %2380 = vmatpush1.msra.mxu0 0.0
      %2381 = vmatprep.subr.mxu0 0.0
      %2382 = vmatpush1.msra.mxu0 0.0
      %2383 = vmatprep.subr.mxu0 0.0
      %2384 = vmatpush1.msra.mxu0 0.0
      %2385 = vmatprep.subr.mxu0 0.0
      %2386 = vmatpush1.msra.mxu0 0.0
      %2387 = vmatprep.subr.mxu0 0.0
      %2388 = vmatpush1.msra.mxu0 0.0
      %2389 = vmatprep.subr.mxu0 0.0
      %2390 = vmatpush1.msra.mxu0 0.0
      %2391 = vmatprep.subr.mxu0 0.0
      %2392 = vmatpush1.msra.mxu0 %v523
      %2393 = vmatprep.subr.mxu0 0.0
      %2394 = vmatpush1.msra.mxu0 %v522
      %2395 = vmatprep.subr.mxu0 0.0
      %2396 = vmatpush1.msra.mxu0 %v521
      %2397 = vmatprep.subr.mxu0 0.0
      %2398 = vmatpush1.msra.mxu0 %v520
      %2399 = vmatprep.subr.mxu0 0.0
      %2400 = vmatpush2.msra.mxu0 0.0
      %2401 = vmatprep.subr.mxu0 0.0
      %2402 = vmatpush2.msra.mxu0 0.0
      %2403 = vmatprep.subr.mxu0 0.0
      %2404 = vmatpush2.msra.mxu0 0.0
      %2405 = vmatprep.subr.mxu0 0.0
      %2406 = vmatpush2.msra.mxu0 0.0
      %2407 = vmatprep.subr.mxu0 0.0
      %2408 = vmatpush2.msra.mxu0 0.0
      %2409 = vmatprep.subr.mxu0 0.0
      %2410 = vmatpush2.msra.mxu0 0.0
      %2411 = vmatprep.subr.mxu0 0.0
      %2412 = vmatpush2.msra.mxu0 0.0
      %2413 = vmatprep.subr.mxu0 0.0
      %2414 = vmatpush2.msra.mxu0 0.0
      %2415 = vmatprep.subr.mxu0 0.0
      %2416 = vmatpush2.msra.mxu0 0.0
      %2417 = vmatprep.subr.mxu0 0.0
      %2418 = vmatpush2.msra.mxu0 0.0
      %2419 = vmatprep.subr.mxu0 0.0
      %2420 = vmatpush2.msra.mxu0 0.0
      %2421 = vmatprep.subr.mxu0 0.0
      %2422 = vmatpush2.msra.mxu0 0.0
      %2423 = vmatprep.subr.mxu0 0.0
      %2424 = vmatpush2.msra.mxu0 0.0
      %2425 = vmatprep.subr.mxu0 0.0
      %2426 = vmatpush2.msra.mxu0 0.0
      %2427 = vmatprep.subr.mxu0 0.0
      %2428 = vmatpush2.msra.mxu0 0.0
      %2429 = vmatprep.subr.mxu0 0.0
      %2430 = vmatpush2.msra.mxu0 0.0
      %2431 = vmatprep.mubr.f32.mxu0 0.0
      %2432 = vmatmul.mubr.f32.gmra.mxu0 %v2272
      %v2433 = vpop.f32.mrf.mxu0
      %v2434 = vadd.f32 %v1326, %v2433
      %v2435 = vpop.f32.mrf.mxu0
      %2436 = vmatprep.mubr.f32.mxu0 0.0
      %2437 = vmatmul.mubr.f32.gmra.mxu0 %v2275
      %v2438 = vpop.f32.mrf.mxu0
      %v2439 = vadd.f32 %v1326, %v2438
      %v2440 = vpop.f32.mrf.mxu0
      %2441 = vmatprep.mubr.f32.mxu0 0.0
      %2442 = vmatmul.mubr.f32.gmra.mxu0 %v2278
      %v2443 = vpop.f32.mrf.mxu0
      %v2444 = vadd.f32 %v1326, %v2443
      %v2445 = vpop.f32.mrf.mxu0
      %2446 = vmatprep.mubr.f32.mxu0 0.0
      %2447 = vmatmul.mubr.f32.gmra.mxu0 %v2281
      %v2448 = vpop.f32.mrf.mxu0
      %v2449 = vadd.f32 %v1326, %v2448
      %v2450 = vpop.f32.mrf.mxu0
      %2451 = vmatprep.mubr.f32.mxu0 0.0
      %2452 = vmatmul.mubr.f32.gmra.mxu0 %v2284
      %v2453 = vpop.f32.mrf.mxu0
      %v2454 = vadd.f32 %v1326, %v2453
      %v2455 = vpop.f32.mrf.mxu0
      %2456 = vmatprep.mubr.f32.mxu0 0.0
      %2457 = vmatmul.mubr.f32.gmra.mxu0 %v2287
      %v2458 = vpop.f32.mrf.mxu0
      %v2459 = vadd.f32 %v1326, %v2458
      %v2460 = vpop.f32.mrf.mxu0
      %2461 = vmatprep.mubr.f32.mxu0 0.0
      %2462 = vmatmul.mubr.f32.gmra.mxu0 %v2290
      %v2463 = vpop.f32.mrf.mxu0
      %v2464 = vadd.f32 %v1326, %v2463
      %v2465 = vpop.f32.mrf.mxu0
      %2466 = vmatprep.mubr.f32.mxu0 0.0
      %2467 = vmatmul.mubr.f32.gmra.mxu0 %v2293
      %v2468 = vpop.f32.mrf.mxu0
      %v2469 = vadd.f32 %v1326, %v2468
      %v2470 = vpop.f32.mrf.mxu0
      %2471 = vmatprep.mubr.f32.mxu0 0.0
      %2472 = vmatmul.mubr.f32.gmra.mxu0 %v2296
      %v2473 = vpop.f32.mrf.mxu0
      %v2474 = vadd.f32 %v1326, %v2473
      %v2475 = vpop.f32.mrf.mxu0
      %2476 = vmatprep.mubr.f32.mxu0 0.0
      %2477 = vmatmul.mubr.f32.gmra.mxu0 %v2299
      %v2478 = vpop.f32.mrf.mxu0
      %v2479 = vadd.f32 %v1326, %v2478
      %v2480 = vpop.f32.mrf.mxu0
      %2481 = vmatprep.mubr.f32.mxu0 0.0
      %2482 = vmatmul.mubr.f32.gmra.mxu0 %v2302
      %v2483 = vpop.f32.mrf.mxu0
      %v2484 = vadd.f32 %v1326, %v2483
      %v2485 = vpop.f32.mrf.mxu0
      %2486 = vmatprep.mubr.f32.mxu0 0.0
      %2487 = vmatmul.mubr.f32.gmra.mxu0 %v2305
      %v2488 = vpop.f32.mrf.mxu0
      %v2489 = vadd.f32 %v1326, %v2488
      %v2490 = vpop.f32.mrf.mxu0
      %2491 = vmatprep.mubr.f32.mxu0 0.0
      %2492 = vmatmul.mubr.f32.gmra.mxu0 %v2308
      %v2493 = vpop.f32.mrf.mxu0
      %v2494 = vadd.f32 %v1326, %v2493
      %v2495 = vpop.f32.mrf.mxu0
      %2496 = vmatprep.mubr.f32.mxu0 0.0
      %2497 = vmatmul.mubr.f32.gmra.mxu0 %v2311
      %v2498 = vpop.f32.mrf.mxu0
      %v2499 = vadd.f32 %v1326, %v2498
      %v2500 = vpop.f32.mrf.mxu0
      %2501 = vmatprep.mubr.f32.mxu0 0.0
      %2502 = vmatmul.mubr.f32.gmra.mxu0 %v2314
      %v2503 = vpop.f32.mrf.mxu0
      %v2504 = vadd.f32 %v1326, %v2503
      %v2505 = vpop.f32.mrf.mxu0
      %2506 = vmatprep.mubr.f32.mxu0 0.0
      %2507 = vmatmul.mubr.f32.gmra.mxu0 %v2317
      %v2508 = vpop.f32.mrf.mxu0
      %v2509 = vadd.f32 %v1326, %v2508
      %v2510 = vpop.f32.mrf.mxu0
      %2511 = vmatprep.mubr.f32.mxu0 0.0
      %2512 = vmatmul.mubr.f32.gmra.mxu0 %v2320
      %v2513 = vpop.f32.mrf.mxu0
      %v2514 = vadd.f32 %v1326, %v2513
      %v2515 = vpop.f32.mrf.mxu0
      %2516 = vmatprep.mubr.f32.mxu0 0.0
      %2517 = vmatmul.mubr.f32.gmra.mxu0 %v2323
      %v2518 = vpop.f32.mrf.mxu0
      %v2519 = vadd.f32 %v1326, %v2518
      %v2520 = vpop.f32.mrf.mxu0
      %2521 = vmatprep.mubr.f32.mxu0 0.0
      %2522 = vmatmul.mubr.f32.gmra.mxu0 %v2326
      %v2523 = vpop.f32.mrf.mxu0
      %v2524 = vadd.f32 %v1326, %v2523
      %v2525 = vpop.f32.mrf.mxu0
      %2526 = vmatprep.mubr.f32.mxu0 0.0
      %2527 = vmatmul.mubr.f32.gmra.mxu0 %v2329
      %v2528 = vpop.f32.mrf.mxu0
      %v2529 = vadd.f32 %v1326, %v2528
      %v2530 = vpop.f32.mrf.mxu0
      %2531 = vmatprep.mubr.f32.mxu0 0.0
      %2532 = vmatmul.mubr.f32.gmra.mxu0 %v2332
      %v2533 = vpop.f32.mrf.mxu0
      %v2534 = vadd.f32 %v1326, %v2533
      %v2535 = vpop.f32.mrf.mxu0
      %2536 = vmatprep.mubr.f32.mxu0 0.0
      %2537 = vmatmul.mubr.f32.gmra.mxu0 %v2335
      %v2538 = vpop.f32.mrf.mxu0
      %v2539 = vadd.f32 %v1326, %v2538
      %v2540 = vpop.f32.mrf.mxu0
      %2541 = vmatprep.mubr.f32.mxu0 0.0
      %2542 = vmatmul.mubr.f32.gmra.mxu0 %v2338
      %v2543 = vpop.f32.mrf.mxu0
      %v2544 = vadd.f32 %v1326, %v2543
      %v2545 = vpop.f32.mrf.mxu0
      %2546 = vmatprep.mubr.f32.mxu0 0.0
      %2547 = vmatmul.mubr.f32.gmra.mxu0 %v2341
      %v2548 = vpop.f32.mrf.mxu0
      %v2549 = vadd.f32 %v1326, %v2548
      %v2550 = vpop.f32.mrf.mxu0
      %2551 = vmatprep.mubr.f32.mxu0 0.0
      %2552 = vmatmul.mubr.f32.gmra.mxu0 %v2344
      %v2553 = vpop.f32.mrf.mxu0
      %v2554 = vadd.f32 %v1326, %v2553
      %v2555 = vpop.f32.mrf.mxu0
      %2556 = vmatprep.mubr.f32.mxu0 0.0
      %2557 = vmatmul.mubr.f32.gmra.mxu0 %v2347
      %v2558 = vpop.f32.mrf.mxu0
      %v2559 = vadd.f32 %v1326, %v2558
      %v2560 = vpop.f32.mrf.mxu0
      %2561 = vmatprep.mubr.f32.mxu0 0.0
      %2562 = vmatmul.mubr.f32.gmra.mxu0 %v2350
      %v2563 = vpop.f32.mrf.mxu0
      %v2564 = vadd.f32 %v1326, %v2563
      %v2565 = vpop.f32.mrf.mxu0
      %2566 = vmatprep.mubr.f32.mxu0 0.0
      %2567 = vmatmul.mubr.f32.gmra.mxu0 %v2353
      %v2568 = vpop.f32.mrf.mxu0
      %v2569 = vadd.f32 %v1326, %v2568
      %v2570 = vpop.f32.mrf.mxu0
      %2571 = vmatprep.mubr.f32.mxu0 0.0
      %2572 = vmatmul.mubr.f32.gmra.mxu0 %v2356
      %v2573 = vpop.f32.mrf.mxu0
      %v2574 = vadd.f32 %v1326, %v2573
      %v2575 = vpop.f32.mrf.mxu0
      %2576 = vmatprep.mubr.f32.mxu0 0.0
      %2577 = vmatmul.mubr.f32.gmra.mxu0 %v2359
      %v2578 = vpop.f32.mrf.mxu0
      %v2579 = vadd.f32 %v1326, %v2578
      %v2580 = vpop.f32.mrf.mxu0
      %2581 = vmatprep.mubr.f32.mxu0 0.0
      %2582 = vmatmul.mubr.f32.gmra.mxu0 %v2362
      %v2583 = vpop.f32.mrf.mxu0
      %v2584 = vadd.f32 %v1326, %v2583
      %v2585 = vpop.f32.mrf.mxu0
      %2586 = vmatprep.mubr.f32.mxu0 0.0
      %2587 = vmatmul.mubr.f32.gmra.mxu0 %v2365
      %v2588 = vpop.f32.mrf.mxu0
      %v2589 = vadd.f32 %v1326, %v2588
      %v2590 = vpop.f32.mrf.mxu0
      %2591 = vdwg.mxu0
      %v2592 = vtanh.pop %v2434
      %v2593 = vtanh.pop %v2439
      %v2594 = vtanh.pop %v2444
      %v2595 = vtanh.pop %v2449
      %v2596 = vtanh.pop %v2454
      %v2597 = vtanh.pop %v2459
      %v2598 = vtanh.pop %v2464
      %v2599 = vtanh.pop %v2469
      %v2600 = vtanh.pop %v2474
      %v2601 = vtanh.pop %v2479
      %v2602 = vtanh.pop %v2484
      %v2603 = vtanh.pop %v2489
      %v2604 = vtanh.pop %v2494
      %v2605 = vtanh.pop %v2499
      %v2606 = vtanh.pop %v2504
      %v2607 = vtanh.pop %v2509
      %v2608 = vtanh.pop %v2514
      %v2609 = vtanh.pop %v2519
      %v2610 = vtanh.pop %v2524
      %v2611 = vtanh.pop %v2529
      %v2612 = vtanh.pop %v2534
      %v2613 = vtanh.pop %v2539
      %v2614 = vtanh.pop %v2544
      %v2615 = vtanh.pop %v2549
      %v2616 = vtanh.pop %v2554
      %v2617 = vtanh.pop %v2559
      %v2618 = vtanh.pop %v2564
      %v2619 = vtanh.pop %v2569
      %v2620 = vtanh.pop %v2574
      %v2621 = vtanh.pop %v2579
      %v2622 = vtanh.pop %v2584
      %v2623 = vtanh.pop %v2589
      %v2624 = vmul.f32 %v2592, %v1686
      %v2625 = vmul.f32 %v2593, %v1686
      %v2626 = vmul.f32 %v2594, %v1686
      %v2627 = vmul.f32 %v2595, %v1686
      %v2628 = vmul.f32 %v2596, %v1686
      %v2629 = vmul.f32 %v2597, %v1686
      %v2630 = vmul.f32 %v2598, %v1686
      %v2631 = vmul.f32 %v2599, %v1686
      %v2632 = vmul.f32 %v2600, %v1686
      %v2633 = vmul.f32 %v2601, %v1686
      %v2634 = vmul.f32 %v2602, %v1686
      %v2635 = vmul.f32 %v2603, %v1686
      %v2636 = vmul.f32 %v2604, %v1686
      %v2637 = vmul.f32 %v2605, %v1686
      %v2638 = vmul.f32 %v2606, %v1686
      %v2639 = vmul.f32 %v2607, %v1686
      %v2640 = vmul.f32 %v2608, %v1686
      %v2641 = vmul.f32 %v2609, %v1686
      %v2642 = vmul.f32 %v2610, %v1686
      %v2643 = vmul.f32 %v2611, %v1686
      %v2644 = vmul.f32 %v2612, %v1686
      %v2645 = vmul.f32 %v2613, %v1686
      %v2646 = vmul.f32 %v2614, %v1686
      %v2647 = vmul.f32 %v2615, %v1686
      %v2648 = vmul.f32 %v2616, %v1686
      %v2649 = vmul.f32 %v2617, %v1686
      %v2650 = vmul.f32 %v2618, %v1686
      %v2651 = vmul.f32 %v2619, %v1686
      %v2652 = vmul.f32 %v2620, %v1686
      %v2653 = vmul.f32 %v2621, %v1686
      %v2654 = vmul.f32 %v2622, %v1686
      %v2655 = vmul.f32 %v2623, %v1686
      %v2656 = vsel %vm1328, %v2624, 0.0
      %2657 = vadd.xlane.f32.xlu0 %v2656
      %v2658 = vpop.xlane.xlu0 %2657
      %v2659 = vsel %vm1328, %v2625, 0.0
      %2660 = vadd.xlane.f32.xlu0 %v2659
      %v2661 = vpop.xlane.xlu0 %2660
      %v2662 = vsel %vm1328, %v2626, 0.0
      %2663 = vadd.xlane.f32.xlu0 %v2662
      %v2664 = vpop.xlane.xlu0 %2663
      %v2665 = vsel %vm1328, %v2627, 0.0
      %2666 = vadd.xlane.f32.xlu0 %v2665
      %v2667 = vpop.xlane.xlu0 %2666
      %v2668 = vsel %vm1328, %v2628, 0.0
      %2669 = vadd.xlane.f32.xlu0 %v2668
      %v2670 = vpop.xlane.xlu0 %2669
      %v2671 = vsel %vm1328, %v2629, 0.0
      %2672 = vadd.xlane.f32.xlu0 %v2671
      %v2673 = vpop.xlane.xlu0 %2672
      %v2674 = vsel %vm1328, %v2630, 0.0
      %2675 = vadd.xlane.f32.xlu0 %v2674
      %v2676 = vpop.xlane.xlu0 %2675
      %v2677 = vsel %vm1328, %v2631, 0.0
      %2678 = vadd.xlane.f32.xlu0 %v2677
      %v2679 = vpop.xlane.xlu0 %2678
      %v2680 = vsel %vm1328, %v2632, 0.0
      %2681 = vadd.xlane.f32.xlu0 %v2680
      %v2682 = vpop.xlane.xlu0 %2681
      %v2683 = vsel %vm1328, %v2633, 0.0
      %2684 = vadd.xlane.f32.xlu0 %v2683
      %v2685 = vpop.xlane.xlu0 %2684
      %v2686 = vsel %vm1328, %v2634, 0.0
      %2687 = vadd.xlane.f32.xlu0 %v2686
      %v2688 = vpop.xlane.xlu0 %2687
      %v2689 = vsel %vm1328, %v2635, 0.0
      %2690 = vadd.xlane.f32.xlu0 %v2689
      %v2691 = vpop.xlane.xlu0 %2690
      %v2692 = vsel %vm1328, %v2636, 0.0
      %2693 = vadd.xlane.f32.xlu0 %v2692
      %v2694 = vpop.xlane.xlu0 %2693
      %v2695 = vsel %vm1328, %v2637, 0.0
      %2696 = vadd.xlane.f32.xlu0 %v2695
      %v2697 = vpop.xlane.xlu0 %2696
      %v2698 = vsel %vm1328, %v2638, 0.0
      %2699 = vadd.xlane.f32.xlu0 %v2698
      %v2700 = vpop.xlane.xlu0 %2699
      %v2701 = vsel %vm1328, %v2639, 0.0
      %2702 = vadd.xlane.f32.xlu0 %v2701
      %v2703 = vpop.xlane.xlu0 %2702
      %v2704 = vsel %vm1328, %v2640, 0.0
      %2705 = vadd.xlane.f32.xlu0 %v2704
      %v2706 = vpop.xlane.xlu0 %2705
      %v2707 = vsel %vm1328, %v2641, 0.0
      %2708 = vadd.xlane.f32.xlu0 %v2707
      %v2709 = vpop.xlane.xlu0 %2708
      %v2710 = vsel %vm1328, %v2642, 0.0
      %2711 = vadd.xlane.f32.xlu0 %v2710
      %v2712 = vpop.xlane.xlu0 %2711
      %v2713 = vsel %vm1328, %v2643, 0.0
      %2714 = vadd.xlane.f32.xlu0 %v2713
      %v2715 = vpop.xlane.xlu0 %2714
      %v2716 = vsel %vm1328, %v2644, 0.0
      %2717 = vadd.xlane.f32.xlu0 %v2716
      %v2718 = vpop.xlane.xlu0 %2717
      %v2719 = vsel %vm1328, %v2645, 0.0
      %2720 = vadd.xlane.f32.xlu0 %v2719
      %v2721 = vpop.xlane.xlu0 %2720
      %v2722 = vsel %vm1328, %v2646, 0.0
      %2723 = vadd.xlane.f32.xlu0 %v2722
      %v2724 = vpop.xlane.xlu0 %2723
      %v2725 = vsel %vm1328, %v2647, 0.0
      %2726 = vadd.xlane.f32.xlu0 %v2725
      %v2727 = vpop.xlane.xlu0 %2726
      %v2728 = vsel %vm1328, %v2648, 0.0
      %2729 = vadd.xlane.f32.xlu0 %v2728
      %v2730 = vpop.xlane.xlu0 %2729
      %v2731 = vsel %vm1328, %v2649, 0.0
      %2732 = vadd.xlane.f32.xlu0 %v2731
      %v2733 = vpop.xlane.xlu0 %2732
      %v2734 = vsel %vm1328, %v2650, 0.0
      %2735 = vadd.xlane.f32.xlu0 %v2734
      %v2736 = vpop.xlane.xlu0 %2735
      %v2737 = vsel %vm1328, %v2651, 0.0
      %2738 = vadd.xlane.f32.xlu0 %v2737
      %v2739 = vpop.xlane.xlu0 %2738
      %v2740 = vsel %vm1328, %v2652, 0.0
      %2741 = vadd.xlane.f32.xlu0 %v2740
      %v2742 = vpop.xlane.xlu0 %2741
      %v2743 = vsel %vm1328, %v2653, 0.0
      %2744 = vadd.xlane.f32.xlu0 %v2743
      %v2745 = vpop.xlane.xlu0 %2744
      %v2746 = vsel %vm1328, %v2654, 0.0
      %2747 = vadd.xlane.f32.xlu0 %v2746
      %v2748 = vpop.xlane.xlu0 %2747
      %v2749 = vsel %vm1328, %v2655, 0.0
      %2750 = vadd.xlane.f32.xlu0 %v2749
      %v2751 = vpop.xlane.xlu0 %2750
      %v2752 = vadd.f32 %v2658, %v1820
      %v2753 = vadd.f32 %v2661, %v1820
      %v2754 = vadd.f32 %v2664, %v1820
      %v2755 = vadd.f32 %v2667, %v1820
      %v2756 = vadd.f32 %v2670, %v1820
      %v2757 = vadd.f32 %v2673, %v1820
      %v2758 = vadd.f32 %v2676, %v1820
      %v2759 = vadd.f32 %v2679, %v1820
      %v2760 = vadd.f32 %v2682, %v1820
      %v2761 = vadd.f32 %v2685, %v1820
      %v2762 = vadd.f32 %v2688, %v1820
      %v2763 = vadd.f32 %v2691, %v1820
      %v2764 = vadd.f32 %v2694, %v1820
      %v2765 = vadd.f32 %v2697, %v1820
      %v2766 = vadd.f32 %v2700, %v1820
      %v2767 = vadd.f32 %v2703, %v1820
      %v2768 = vadd.f32 %v2706, %v1820
      %v2769 = vadd.f32 %v2709, %v1820
      %v2770 = vadd.f32 %v2712, %v1820
      %v2771 = vadd.f32 %v2715, %v1820
      %v2772 = vadd.f32 %v2718, %v1820
      %v2773 = vadd.f32 %v2721, %v1820
      %v2774 = vadd.f32 %v2724, %v1820
      %v2775 = vadd.f32 %v2727, %v1820
      %v2776 = vadd.f32 %v2730, %v1820
      %v2777 = vadd.f32 %v2733, %v1820
      %v2778 = vadd.f32 %v2736, %v1820
      %v2779 = vadd.f32 %v2739, %v1820
      %v2780 = vadd.f32 %v2742, %v1820
      %v2781 = vadd.f32 %v2745, %v1820
      %v2782 = vadd.f32 %v2748, %v1820
      %v2783 = vadd.f32 %v2751, %v1820
      %v2784 = vsub.f32 %v1886, %v2752
      %v2785 = vsub.f32 %v1887, %v2753
      %v2786 = vsub.f32 %v1888, %v2754
      %v2787 = vsub.f32 %v1889, %v2755
      %v2788 = vsub.f32 %v1890, %v2756
      %v2789 = vsub.f32 %v1891, %v2757
      %v2790 = vsub.f32 %v1892, %v2758
      %v2791 = vsub.f32 %v1893, %v2759
      %v2792 = vsub.f32 %v1894, %v2760
      %v2793 = vsub.f32 %v1895, %v2761
      %v2794 = vsub.f32 %v1896, %v2762
      %v2795 = vsub.f32 %v1897, %v2763
      %v2796 = vsub.f32 %v1898, %v2764
      %v2797 = vsub.f32 %v1899, %v2765
      %v2798 = vsub.f32 %v1900, %v2766
      %v2799 = vsub.f32 %v1901, %v2767
      %v2800 = vsub.f32 %v1902, %v2768
      %v2801 = vsub.f32 %v1903, %v2769
      %v2802 = vsub.f32 %v1904, %v2770
      %v2803 = vsub.f32 %v1905, %v2771
      %v2804 = vsub.f32 %v1906, %v2772
      %v2805 = vsub.f32 %v1907, %v2773
      %v2806 = vsub.f32 %v1908, %v2774
      %v2807 = vsub.f32 %v1909, %v2775
      %v2808 = vsub.f32 %v1910, %v2776
      %v2809 = vsub.f32 %v1911, %v2777
      %v2810 = vsub.f32 %v1912, %v2778
      %v2811 = vsub.f32 %v1913, %v2779
      %v2812 = vsub.f32 %v1914, %v2780
      %v2813 = vsub.f32 %v1915, %v2781
      %v2814 = vsub.f32 %v1916, %v2782
      %v2815 = vsub.f32 %v1917, %v2783
      %v2816 = vmul.f32 %v2784, 1.442695
      %v2817 = vpow.pop %v2816
      %v2818 = vmul.f32 %v2785, 1.442695
      %v2819 = vpow.pop %v2818
      %v2820 = vmul.f32 %v2786, 1.442695
      %v2821 = vpow.pop %v2820
      %v2822 = vmul.f32 %v2787, 1.442695
      %v2823 = vpow.pop %v2822
      %v2824 = vmul.f32 %v2788, 1.442695
      %v2825 = vpow.pop %v2824
      %v2826 = vmul.f32 %v2789, 1.442695
      %v2827 = vpow.pop %v2826
      %v2828 = vmul.f32 %v2790, 1.442695
      %v2829 = vpow.pop %v2828
      %v2830 = vmul.f32 %v2791, 1.442695
      %v2831 = vpow.pop %v2830
      %v2832 = vmul.f32 %v2792, 1.442695
      %v2833 = vpow.pop %v2832
      %v2834 = vmul.f32 %v2793, 1.442695
      %v2835 = vpow.pop %v2834
      %v2836 = vmul.f32 %v2794, 1.442695
      %v2837 = vpow.pop %v2836
      %v2838 = vmul.f32 %v2795, 1.442695
      %v2839 = vpow.pop %v2838
      %v2840 = vmul.f32 %v2796, 1.442695
      %v2841 = vpow.pop %v2840
      %v2842 = vmul.f32 %v2797, 1.442695
      %v2843 = vpow.pop %v2842
      %v2844 = vmul.f32 %v2798, 1.442695
      %v2845 = vpow.pop %v2844
      %v2846 = vmul.f32 %v2799, 1.442695
      %v2847 = vpow.pop %v2846
      %v2848 = vmul.f32 %v2800, 1.442695
      %v2849 = vpow.pop %v2848
      %v2850 = vmul.f32 %v2801, 1.442695
      %v2851 = vpow.pop %v2850
      %v2852 = vmul.f32 %v2802, 1.442695
      %v2853 = vpow.pop %v2852
      %v2854 = vmul.f32 %v2803, 1.442695
      %v2855 = vpow.pop %v2854
      %v2856 = vmul.f32 %v2804, 1.442695
      %v2857 = vpow.pop %v2856
      %v2858 = vmul.f32 %v2805, 1.442695
      %v2859 = vpow.pop %v2858
      %v2860 = vmul.f32 %v2806, 1.442695
      %v2861 = vpow.pop %v2860
      %v2862 = vmul.f32 %v2807, 1.442695
      %v2863 = vpow.pop %v2862
      %v2864 = vmul.f32 %v2808, 1.442695
      %v2865 = vpow.pop %v2864
      %v2866 = vmul.f32 %v2809, 1.442695
      %v2867 = vpow.pop %v2866
      %v2868 = vmul.f32 %v2810, 1.442695
      %v2869 = vpow.pop %v2868
      %v2870 = vmul.f32 %v2811, 1.442695
      %v2871 = vpow.pop %v2870
      %v2872 = vmul.f32 %v2812, 1.442695
      %v2873 = vpow.pop %v2872
      %v2874 = vmul.f32 %v2813, 1.442695
      %v2875 = vpow.pop %v2874
      %v2876 = vmul.f32 %v2814, 1.442695
      %v2877 = vpow.pop %v2876
      %v2878 = vmul.f32 %v2815, 1.442695
      %v2879 = vpow.pop %v2878
      %v2880 = vld [vmem:[%s506] sm:$0xff]
      %v2881 = vld [vmem:[%s506 + $0x8] sm:$0xff]
      %v2882 = vld [vmem:[%s506 + $0x10] sm:$0xff]
      %v2883 = vld [vmem:[%s506 + $0x18] sm:$0xff]
      %v2884 = vld [vmem:[%s506 + $0x20] sm:$0xff]
      %v2885 = vld [vmem:[%s506 + $0x28] sm:$0xff]
      %v2886 = vld [vmem:[%s506 + $0x30] sm:$0xff]
      %v2887 = vld [vmem:[%s506 + $0x38] sm:$0xff]
      %v2888 = vld [vmem:[%s506 + $0x40] sm:$0xff]
      %v2889 = vld [vmem:[%s506 + $0x48] sm:$0xff]
      %v2890 = vld [vmem:[%s506 + $0x50] sm:$0xff]
      %v2891 = vld [vmem:[%s506 + $0x58] sm:$0xff]
      %v2892 = vld [vmem:[%s506 + $0x60] sm:$0xff]
      %v2893 = vld [vmem:[%s506 + $0x68] sm:$0xff]
      %v2894 = vld [vmem:[%s506 + $0x70] sm:$0xff]
      %v2895 = vld [vmem:[%s506 + $0x78] sm:$0xff]
      %v2896 = vld [vmem:[%s506 + $0x80] sm:$0xff]
      %v2897 = vld [vmem:[%s506 + $0x88] sm:$0xff]
      %v2898 = vld [vmem:[%s506 + $0x90] sm:$0xff]
      %v2899 = vld [vmem:[%s506 + $0x98] sm:$0xff]
      %v2900 = vld [vmem:[%s506 + $0xa0] sm:$0xff]
      %v2901 = vld [vmem:[%s506 + $0xa8] sm:$0xff]
      %v2902 = vld [vmem:[%s506 + $0xb0] sm:$0xff]
      %v2903 = vld [vmem:[%s506 + $0xb8] sm:$0xff]
      %v2904 = vld [vmem:[%s506 + $0xc0] sm:$0xff]
      %v2905 = vld [vmem:[%s506 + $0xc8] sm:$0xff]
      %v2906 = vld [vmem:[%s506 + $0xd0] sm:$0xff]
      %v2907 = vld [vmem:[%s506 + $0xd8] sm:$0xff]
      %v2908 = vld [vmem:[%s506 + $0xe0] sm:$0xff]
      %v2909 = vld [vmem:[%s506 + $0xe8] sm:$0xff]
      %v2910 = vld [vmem:[%s506 + $0xf0] sm:$0xff]
      %v2911 = vld [vmem:[%s506 + $0xf8] sm:$0xff]
      %v2912 = vadd.f32 %v2817, %v2880
      %v2913 = vadd.f32 %v2819, %v2881
      %v2914 = vadd.f32 %v2821, %v2882
      %v2915 = vadd.f32 %v2823, %v2883
      %v2916 = vadd.f32 %v2825, %v2884
      %v2917 = vadd.f32 %v2827, %v2885
      %v2918 = vadd.f32 %v2829, %v2886
      %v2919 = vadd.f32 %v2831, %v2887
      %v2920 = vadd.f32 %v2833, %v2888
      %v2921 = vadd.f32 %v2835, %v2889
      %v2922 = vadd.f32 %v2837, %v2890
      %v2923 = vadd.f32 %v2839, %v2891
      %v2924 = vadd.f32 %v2841, %v2892
      %v2925 = vadd.f32 %v2843, %v2893
      %v2926 = vadd.f32 %v2845, %v2894
      %v2927 = vadd.f32 %v2847, %v2895
      %v2928 = vadd.f32 %v2849, %v2896
      %v2929 = vadd.f32 %v2851, %v2897
      %v2930 = vadd.f32 %v2853, %v2898
      %v2931 = vadd.f32 %v2855, %v2899
      %v2932 = vadd.f32 %v2857, %v2900
      %v2933 = vadd.f32 %v2859, %v2901
      %v2934 = vadd.f32 %v2861, %v2902
      %v2935 = vadd.f32 %v2863, %v2903
      %v2936 = vadd.f32 %v2865, %v2904
      %v2937 = vadd.f32 %v2867, %v2905
      %v2938 = vadd.f32 %v2869, %v2906
      %v2939 = vadd.f32 %v2871, %v2907
      %v2940 = vadd.f32 %v2873, %v2908
      %v2941 = vadd.f32 %v2875, %v2909
      %v2942 = vadd.f32 %v2877, %v2910
      %v2943 = vadd.f32 %v2879, %v2911
      %v2944 = vrcp.pop %v2912
      %v2945 = vmul.f32 %v2817, %v2944
      %v2946 = vrcp.pop %v2913
      %v2947 = vmul.f32 %v2819, %v2946
      %v2948 = vrcp.pop %v2914
      %v2949 = vmul.f32 %v2821, %v2948
      %v2950 = vrcp.pop %v2915
      %v2951 = vmul.f32 %v2823, %v2950
      %v2952 = vrcp.pop %v2916
      %v2953 = vmul.f32 %v2825, %v2952
      %v2954 = vrcp.pop %v2917
      %v2955 = vmul.f32 %v2827, %v2954
      %v2956 = vrcp.pop %v2918
      %v2957 = vmul.f32 %v2829, %v2956
      %v2958 = vrcp.pop %v2919
      %v2959 = vmul.f32 %v2831, %v2958
      %v2960 = vrcp.pop %v2920
      %v2961 = vmul.f32 %v2833, %v2960
      %v2962 = vrcp.pop %v2921
      %v2963 = vmul.f32 %v2835, %v2962
      %v2964 = vrcp.pop %v2922
      %v2965 = vmul.f32 %v2837, %v2964
      %v2966 = vrcp.pop %v2923
      %v2967 = vmul.f32 %v2839, %v2966
      %v2968 = vrcp.pop %v2924
      %v2969 = vmul.f32 %v2841, %v2968
      %v2970 = vrcp.pop %v2925
      %v2971 = vmul.f32 %v2843, %v2970
      %v2972 = vrcp.pop %v2926
      %v2973 = vmul.f32 %v2845, %v2972
      %v2974 = vrcp.pop %v2927
      %v2975 = vmul.f32 %v2847, %v2974
      %v2976 = vrcp.pop %v2928
      %v2977 = vmul.f32 %v2849, %v2976
      %v2978 = vrcp.pop %v2929
      %v2979 = vmul.f32 %v2851, %v2978
      %v2980 = vrcp.pop %v2930
      %v2981 = vmul.f32 %v2853, %v2980
      %v2982 = vrcp.pop %v2931
      %v2983 = vmul.f32 %v2855, %v2982
      %v2984 = vrcp.pop %v2932
      %v2985 = vmul.f32 %v2857, %v2984
      %v2986 = vrcp.pop %v2933
      %v2987 = vmul.f32 %v2859, %v2986
      %v2988 = vrcp.pop %v2934
      %v2989 = vmul.f32 %v2861, %v2988
      %v2990 = vrcp.pop %v2935
      %v2991 = vmul.f32 %v2863, %v2990
      %v2992 = vrcp.pop %v2936
      %v2993 = vmul.f32 %v2865, %v2992
      %v2994 = vrcp.pop %v2937
      %v2995 = vmul.f32 %v2867, %v2994
      %v2996 = vrcp.pop %v2938
      %v2997 = vmul.f32 %v2869, %v2996
      %v2998 = vrcp.pop %v2939
      %v2999 = vmul.f32 %v2871, %v2998
      %v3000 = vrcp.pop %v2940
      %v3001 = vmul.f32 %v2873, %v3000
      %v3002 = vrcp.pop %v2941
      %v3003 = vmul.f32 %v2875, %v3002
      %v3004 = vrcp.pop %v2942
      %v3005 = vmul.f32 %v2877, %v3004
      %v3006 = vrcp.pop %v2943
      %v3007 = vmul.f32 %v2879, %v3006
      %vm3008 = vcmask 7168
      %3009 = vst.msk [vmem:[%s512] sm:$0xff] %vm3008, %v2945
      %3010 = vst.msk [vmem:[%s512 + $0x8] sm:$0xff] %vm3008, %v2947
      %3011 = vst.msk [vmem:[%s512 + $0x10] sm:$0xff] %vm3008, %v2949
      %3012 = vst.msk [vmem:[%s512 + $0x18] sm:$0xff] %vm3008, %v2951
      %3013 = vst.msk [vmem:[%s512 + $0x20] sm:$0xff] %vm3008, %v2953
      %3014 = vst.msk [vmem:[%s512 + $0x28] sm:$0xff] %vm3008, %v2955
      %3015 = vst.msk [vmem:[%s512 + $0x30] sm:$0xff] %vm3008, %v2957
      %3016 = vst.msk [vmem:[%s512 + $0x38] sm:$0xff] %vm3008, %v2959
      %3017 = vst.msk [vmem:[%s512 + $0x40] sm:$0xff] %vm3008, %v2961
      %3018 = vst.msk [vmem:[%s512 + $0x48] sm:$0xff] %vm3008, %v2963
      %3019 = vst.msk [vmem:[%s512 + $0x50] sm:$0xff] %vm3008, %v2965
      %3020 = vst.msk [vmem:[%s512 + $0x58] sm:$0xff] %vm3008, %v2967
      %3021 = vst.msk [vmem:[%s512 + $0x60] sm:$0xff] %vm3008, %v2969
      %3022 = vst.msk [vmem:[%s512 + $0x68] sm:$0xff] %vm3008, %v2971
      %3023 = vst.msk [vmem:[%s512 + $0x70] sm:$0xff] %vm3008, %v2973
      %3024 = vst.msk [vmem:[%s512 + $0x78] sm:$0xff] %vm3008, %v2975
      %3025 = vst.msk [vmem:[%s512 + $0x80] sm:$0xff] %vm3008, %v2977
      %3026 = vst.msk [vmem:[%s512 + $0x88] sm:$0xff] %vm3008, %v2979
      %3027 = vst.msk [vmem:[%s512 + $0x90] sm:$0xff] %vm3008, %v2981
      %3028 = vst.msk [vmem:[%s512 + $0x98] sm:$0xff] %vm3008, %v2983
      %3029 = vst.msk [vmem:[%s512 + $0xa0] sm:$0xff] %vm3008, %v2985
      %3030 = vst.msk [vmem:[%s512 + $0xa8] sm:$0xff] %vm3008, %v2987
      %3031 = vst.msk [vmem:[%s512 + $0xb0] sm:$0xff] %vm3008, %v2989
      %3032 = vst.msk [vmem:[%s512 + $0xb8] sm:$0xff] %vm3008, %v2991
      %3033 = vst.msk [vmem:[%s512 + $0xc0] sm:$0xff] %vm3008, %v2993
      %3034 = vst.msk [vmem:[%s512 + $0xc8] sm:$0xff] %vm3008, %v2995
      %3035 = vst.msk [vmem:[%s512 + $0xd0] sm:$0xff] %vm3008, %v2997
      %3036 = vst.msk [vmem:[%s512 + $0xd8] sm:$0xff] %vm3008, %v2999
      %3037 = vst.msk [vmem:[%s512 + $0xe0] sm:$0xff] %vm3008, %v3001
      %3038 = vst.msk [vmem:[%s512 + $0xe8] sm:$0xff] %vm3008, %v3003
      %3039 = vst.msk [vmem:[%s512 + $0xf0] sm:$0xff] %vm3008, %v3005
      %3040 = vst.msk [vmem:[%s512 + $0xf8] sm:$0xff] %vm3008, %v3007
      %s3041 = smul.u32 32, %s28
      %p3042 = scmp.lt.s32.totalorder %s3041, 63
      %s3043 = scalar_select %p3042, %s3041, 63
      %s3044 = smul.addr %s3043, 8
      %s3045 = scalar_lea.vmem %s13, %s3044
      // Predicated region
      $region73: #{tpu_custom_call.1} parent=71 // pred_check
        %p3046 = pneg %p339
      $region74: #{tpu_custom_call.1} parent=71 // pred_check_branch
        %3048 = sbr.rel (%p3046) target = $region76
      $region75: #{tpu_custom_call.1} parent=71 // pred_region
        %s3049 = smul.u32 32, %s28
      $region76: #{tpu_custom_call.1} parent=71 // pred_fallthru
        _
    $region72: #{tpu_custom_call.1} parent=5 // pred_fallthru
      _
    %p3050 = scmp.le.s32.totalorder 2, %s23
    // Predicated region
    $region77: #{tpu_custom_call.1} parent=5 // pred_check
      %p3051 = pneg %p3050
    $region78: #{tpu_custom_call.1} parent=5 // pred_check_branch
      %3053 = sbr.rel (%p3051) target = $region80
    $region79: #{tpu_custom_call.1} parent=5 // pred_region
      %s3054 = ssub.s32 %s23, 2
      // Predicated region
      $region81: #{tpu_custom_call.1} parent=79 // pred_check
        %p3055 = pneg %p345
      $region82: #{tpu_custom_call.1} parent=79 // pred_check_branch
        %3057 = sbr.rel (%p3055) target = $region84
      $region83: #{tpu_custom_call.1} parent=79 // pred_region
        %s3058 = smul.u32 32, %s29
        %p3059 = scmp.lt.s32.totalorder %s3058, 63
        %s3060 = scalar_select %p3059, %s3058, 63
        %s3061 = smul.addr %s3060, 8
        %s3062 = scalar_lea.vmem %s13, %s3061
      $region84: #{tpu_custom_call.1} parent=79 // pred_fallthru
        _
    $region80: #{tpu_custom_call.1} parent=5 // pred_fallthru
      _
  $region6: #{tpu_custom_call.1} parent=0 // loop_footer
    %s27 = sadd.s32 1, %s23
  $region7: #{tpu_custom_call.1} parent=0 // loop_footer_branch
    %22 = sbr.rel target = $region3
  $region8: #{tpu_custom_call.1} parent=0 // loop_exit
    _

</llo_original>
